<compile_context>
chip_gen: v7x
topology: tpu7x:2x2x1
jax: 0.10.0
libtpu: 0.0.40
codegen_flags: <defaults>
</compile_context>

<pallas_src>
import functools

import jax
import jax.numpy as jnp
from jax.experimental import pallas as pl
from jax.experimental.pallas import tpu as pltpu


def _round_up(v, m):
    return (v + m - 1) // m * m


# --------------------------------------------------------------------------
# Fused kernel (single invocation, no grid).
#   refs (use_mask=True):  x_ref, m_ref, w_ref, o_ref, patches_ref
#   refs (use_mask=False): x_ref,        w_ref, o_ref, patches_ref
#
#   x_ref       (2*C_PAD, NHW) f32  rows [0:C_PAD)        = column-1 input (zero padded)
#                                   rows [C_PAD:2*C_PAD)  = column-2 input (zero padded)
#   m_ref       (1, NHW)       f32  spatial mask (batch folded onto lanes)
#   w_ref       (L*C_PAD, PR)  bf16 one row-block per conv layer, im2col layout,
#                                   bias folded in at column BIAS_ROW
#   o_ref       (1, NHW)       f32  sigmoid(channel 0) [* mask]
#   patches_ref (PR, NHW)      f32  im2col scratch (8-aligned tap slots + ones row)
# --------------------------------------------------------------------------
def _fused_kernel(*refs, N, H, W, C_PAD, BIAS_ROW, c1_ks, c2_ks, c_ks, use_mask):
    if use_mask:
        x_ref, m_ref, w_ref, o_ref, patches_ref = refs
    else:
        x_ref, w_ref, o_ref, patches_ref = refs
        m_ref = None
    NHW = N * H * W

    # One-time scratch init: zero everything (unused rows must not be NaN/Inf
    # garbage under the zero weight columns), then the bias "ones" row.
    patches_ref[...] = jnp.zeros_like(patches_ref)
    patches_ref[BIAS_ROW:BIAS_ROW + 1, :] = jnp.ones((1, NHW), jnp.float32)

    # Lane-index masks for replicate padding in the flat n*H*W + y*W + x layout.
    lane = jax.lax.broadcasted_iota(jnp.int32, (1, NHW), 1)
    if (W & (W - 1)) == 0:                       # power-of-two fast path
        col = lane & (W - 1)
        row = lane >> (W.bit_length() - 1)
    else:
        col = lane % W
        row = lane // W
    row = (row & (H - 1)) if (H & (H - 1)) == 0 else (row % H)
    is_left, is_right = col == 0, col == (W - 1)
    is_top, is_bot = row == 0, row == (H - 1)

    def shift(a, dy, dx):
        # out[.., y, x] = a[.., clamp(y+dy), clamp(x+dx)] (replicate padding).
        # One XLU rotate + one VPU select per unit step; the top/bottom-row
        # masks also protect image boundaries in the batch-folded layout.
        for _ in range(abs(dy)):
            if dy > 0:      # look one row down: out[i] = a[i + W]
                a = jnp.where(is_bot, a, pltpu.roll(a, NHW - W, axis=1))
            else:           # look one row up:   out[i] = a[i - W]
                a = jnp.where(is_top, a, pltpu.roll(a, W, axis=1))
        for _ in range(abs(dx)):
            if dx > 0:      # look one col right
                a = jnp.where(is_right, a, pltpu.roll(a, NHW - 1, axis=1))
            else:           # look one col left
                a = jnp.where(is_left, a, pltpu.roll(a, 1, axis=1))
        return a

    m = m_ref[...] if use_mask else None

    def conv_block(a, layer, k, relu):
        # a: (C_PAD, NHW) activation slab (padded rows are zero).
        # Conv -> (+bias, folded) -> [ReLU] -> [* mask], one MXU matmul.
        pad = (k - 1) // 2
        t = 0
        for kh in range(k):
            for kw in range(k):
                # 8-aligned, unmasked sublane store of one tap slot.
                patches_ref[t * C_PAD:(t + 1) * C_PAD, :] = shift(a, kh - pad, kw - pad)
                t += 1
        w = w_ref[layer * C_PAD:(layer + 1) * C_PAD, :]            # (C_PAD, PR) bf16
        y = jnp.dot(w, patches_ref[...].astype(jnp.bfloat16),
                    preferred_element_type=jnp.float32)            # (C_PAD, NHW) f32
        if relu:                                                   # Dropout == identity
            y = jnp.maximum(y, 0.0)
        if use_mask:
            y = y * m
        return y

    layer = 0
    x1 = x_ref[0:C_PAD, :]
    for k in c1_ks:
        x1 = conv_block(x1, layer, k, relu=True)
        layer += 1
    x2 = x_ref[C_PAD:2 * C_PAD, :]
    for k in c2_ks:
        x2 = conv_block(x2, layer, k, relu=True)
        layer += 1

    # Channel concat of the two columns: column-2's last-layer outputs were
    # placed at rows [c1_out, c1_out+c2_out) by the weight slab, so this is a
    # plain elementwise add.
    comb = x1 + x2
    for i, k in enumerate(c_ks):
        comb = conv_block(comb, layer, k, relu=(i < len(c_ks) - 1))
        layer += 1

    out = jax.nn.sigmoid(comb[0:1, :])           # only channel 0 is returned
    if use_mask:
        out = out * m
    o_ref[...] = out.astype(o_ref.dtype)


# --------------------------------------------------------------------------
# Wrapper: repack inputs/weights once, launch one fused single-step kernel.
# --------------------------------------------------------------------------
def two_column_conv_forward(x_nchw, mask, feats_1, feats_2,
                            c1_weights, c1_biases,
                            c2_weights, c2_biases,
                            c_weights, c_biases,
                            use_mask=True):
    """x_nchw: (N, C0, H, W); mask: (N, H, W); weights[i]: HWIO (k,k,Cin,Cout);
    biases[i]: (Cout,).  Returns (N, H, W)."""
    x_nchw = x_nchw.astype(jnp.float32)
    N, C0, H, W = x_nchw.shape
    NHW = N * H * W

    feats_1 = tuple(int(f) for f in feats_1)
    feats_2 = tuple(int(f) for f in feats_2)
    c1_ks = tuple(int(w.shape[0]) for w in c1_weights)
    c2_ks = tuple(int(w.shape[0]) for w in c2_weights)
    c_ks = tuple(int(w.shape[0]) for w in c_weights)

    all_w = list(c1_weights) + list(c2_weights) + list(c_weights)
    all_b = list(c1_biases) + list(c2_biases) + list(c_biases)
    c1_out_last = int(c1_weights[-1].shape[-1])
    c2_out_last = int(c2_weights[-1].shape[-1])

    # Channel-slot size: every activation / weight row block is padded to C_PAD
    # sublanes so im2col tap stores and weight-slab slices stay 8-aligned.
    C_PAD = _round_up(max([int(w.shape[2]) for w in all_w]
                          + [int(w.shape[3]) for w in all_w]
                          + [c1_out_last + c2_out_last, len(feats_1), len(feats_2)]), 8)
    max_taps = max(k * k for k in c1_ks + c2_ks + c_ks) * C_PAD
    BIAS_ROW = max_taps
    PR = _round_up(max_taps + 1, 128)            # 128-multiple lane width of the slab

    # ---- inputs: fold the batch onto the lane axis (lane = n*H*W + y*W + x) ----
    x_cf = jnp.transpose(x_nchw.reshape(N, C0, H * W), (1, 0, 2)).reshape(C0, NHW)

    def column_slab(feats):
        rows = x_cf[jnp.asarray(feats), :]                       # (len(feats), NHW)
        return jnp.pad(rows, ((0, C_PAD - len(feats)), (0, 0)))  # zero-pad to C_PAD

    x_in = jnp.concatenate([column_slab(feats_1), column_slab(feats_2)], axis=0)

    # ---- one packed weight+bias slab: (n_layers*C_PAD, PR) bf16 ----
    # Layer l, tap t = kh*k + kw, in-channel ci, out-channel co:
    #   slab[l*C_PAD + out_off + co, t*C_PAD + ci] = w[kh, kw, ci, co]
    #   slab[l*C_PAD + out_off + co, BIAS_ROW]     = b[co]
    # out_off is 0 except column-2's last layer (placed after column-1's outputs
    # so the channel concat is a plain add).
    blocks = []
    c2_last_idx = len(c1_ks) + len(c2_ks) - 1
    for l, (w, b) in enumerate(zip(all_w, all_b)):
        k, _, c_in, c_out = (int(s) for s in w.shape)
        out_off = c1_out_last if l == c2_last_idx else 0
        wk = jnp.transpose(w.astype(jnp.float32).reshape(k * k, c_in, c_out),
                           (2, 0, 1))                            # (Cout, k*k, Cin)
        blk = jnp.zeros((C_PAD, k * k, C_PAD), jnp.float32)
        blk = blk.at[out_off:out_off + c_out, :, :c_in].set(wk)
        blk = blk.reshape(C_PAD, k * k * C_PAD)
        blk = jnp.pad(blk, ((0, 0), (0, PR - k * k * C_PAD)))
        blk = blk.at[out_off:out_off + c_out, BIAS_ROW].set(b.astype(jnp.float32))
        blocks.append(blk)
    w_slab = jnp.concatenate(blocks, axis=0).astype(jnp.bfloat16)   # (L*C_PAD, PR)

    kernel = functools.partial(
        _fused_kernel, N=N, H=H, W=W, C_PAD=C_PAD, BIAS_ROW=BIAS_ROW,
        c1_ks=c1_ks, c2_ks=c2_ks, c_ks=c_ks, use_mask=bool(use_mask))

    inputs = [x_in]
    if use_mask:
        inputs.append(mask.astype(jnp.float32).reshape(1, NHW))
    inputs.append(w_slab)

    # Single grid step: whole (tiny) arrays resident in VMEM, one lane-dense
    # (1, N*H*W) output store, three input DMAs total.
    out_flat = pl.pallas_call(
        kernel,
        out_shape=jax.ShapeDtypeStruct((1, NHW), jnp.float32),
        scratch_shapes=[pltpu.VMEM((PR, NHW), jnp.float32)],
    )(*inputs)
    return out_flat.reshape(N, H, W)


# --------------------------------------------------------------------------
# Pure-JAX reference (lax.conv, HIGHEST precision) for validation.
# --------------------------------------------------------------------------
def _reference_forward(x_nchw, mask, feats_1, feats_2,
                       c1_w, c1_b, c2_w, c2_b, c_w, c_b, use_mask=True):
    x = jnp.transpose(x_nchw, (0, 2, 3, 1)).astype(jnp.float32)   # NHWC
    m = mask.astype(jnp.float32)[..., None]

    def run(xc, ws, bs, relu_flags):
        for w, b, relu in zip(ws, bs, relu_flags):
            k = w.shape[0]
            lo = (k - 1) // 2
            hi = k - 1 - lo
            xp = jnp.pad(xc, ((0, 0), (lo, hi), (lo, hi), (0, 0)), mode="edge")
            y = jax.lax.conv_general_dilated(
                xp, w, window_strides=(1, 1), padding="VALID",
                dimension_numbers=("NHWC", "HWIO", "NHWC"),
                precision=jax.lax.Precision.HIGHEST,
                preferred_element_type=jnp.float32) + b.reshape(1, 1, 1, -1)
            if relu:
                y = jnp.maximum(y, 0.0)
            if use_mask:
                y = y * m
            xc = y
        return xc

    x1 = run(x[..., jnp.array(feats_1)], c1_w, c1_b, [True] * len(c1_w))
    x2 = run(x[..., jnp.array(feats_2)], c2_w, c2_b, [True] * len(c2_w))
    xc = run(jnp.concatenate([x1, x2], axis=-1), c_w, c_b,
             [i < len(c_w) - 1 for i in range(len(c_w))])
    y = jax.nn.sigmoid(xc)
    if use_mask:
        y = y * m
    return y[..., 0]


if __name__ == "__main__":
    # Module config (regression=False): two 2-channel columns -> concat(4+4=8) -> 8 -> 1.
    feats_1 = (0, 1)
    feats_2 = (2, 3)
    c1_channels, c1_kernels = [2, 4], [3]
    c2_channels, c2_kernels = [2, 4], [3]
    c_channels, c_kernels = [8, 8, 1], [3, 3]
    N, H, W = 2, 16, 16

    key = jax.random.PRNGKey(0)

    def init_stack(key, channels, kernels):
        ws, bs = [], []
        for c_in, c_out, k in zip(channels[:-1], channels[1:], kernels):
            key, kw_key, kb_key = jax.random.split(key, 3)
            scale = 1.0 / float(k * k * c_in) ** 0.5
            ws.append(scale * jax.random.normal(kw_key, (k, k, c_in, c_out),
                                                jnp.float32))
            bs.append(0.1 * jax.random.normal(kb_key, (c_out,), jnp.float32))
        return key, ws, bs

    key, c1_w, c1_b = init_stack(key, c1_channels, c1_kernels)
    key, c2_w, c2_b = init_stack(key, c2_channels, c2_kernels)
    key, c_w, c_b = init_stack(key, c_channels, c_kernels)

    key, kx, km = jax.random.split(key, 3)
    x = jax.random.normal(kx, (N, len(feats_1) + len(feats_2), H, W),
                          jnp.float32)
    mask = jax.random.bernoulli(km, 0.7, (N, H, W)).astype(jnp.float32)

    out = two_column_conv_forward(x, mask, feats_1, feats_2,
                                  c1_w, c1_b, c2_w, c2_b, c_w, c_b,
                                  use_mask=True)
    out = jax.block_until_ready(out)

    ref = _reference_forward(x, mask, feats_1, feats_2,
                             c1_w, c1_b, c2_w, c2_b, c_w, c_b, use_mask=True)
    assert out.shape == (N, H, W), out.shape
    # Tolerance accounts for bf16 MXU inputs (f32 accumulate) vs. HIGHEST-precision
    # reference; output is post-sigmoid (bounded in [0, 1]).
    max_err = float(jnp.max(jnp.abs(out - ref)))
    assert jnp.allclose(out, ref, atol=1e-2, rtol=1e-2), max_err

    print("KERNEL_OK")
</pallas_src>

<mosaic_0001>
module attributes {stable_mosaic.version = 11 : i64} {
  func.func @_fused_kernel(%arg0: memref<16x512xf32, #tpu.memory_space<vmem>>, %arg1: memref<1x512xf32, #tpu.memory_space<vmem>>, %arg2: memref<32x128xbf16, #tpu.memory_space<vmem>>, %arg3: memref<1x512xf32, #tpu.memory_space<vmem>>, %arg4: memref<128x512xf32, #tpu.memory_space<vmem>>) attributes {dimension_semantics = [], scalar_prefetch = 0 : i64, scratch_operands = 1 : i64, tpu.core_type = #tpu.core_type<tc>} {
    %cst = arith.constant 0.000000e+00 : f32
    %0 = vector.broadcast %cst : f32 to vector<128x512xf32>
    %c0 = arith.constant 0 : index
    %c0_0 = arith.constant 0 : index
    %1 = vector.load %arg4[%c0, %c0_0] : memref<128x512xf32, #tpu.memory_space<vmem>>, vector<128x512xf32>
    tpu.vector_store %arg4[%c0, %c0_0], %0 {strides = array<i32>} : memref<128x512xf32, #tpu.memory_space<vmem>>, vector<128x512xf32>,
    %cst_1 = arith.constant 1.000000e+00 : f32
    %2 = vector.broadcast %cst_1 : f32 to vector<1x512xf32>
    %c72 = arith.constant 72 : index
    %c0_2 = arith.constant 0 : index
    %3 = vector.load %arg4[%c72, %c0_2] : memref<128x512xf32, #tpu.memory_space<vmem>>, vector<1x512xf32>
    tpu.vector_store %arg4[%c72, %c0_2], %2 {strides = array<i32>} : memref<128x512xf32, #tpu.memory_space<vmem>>, vector<1x512xf32>,
    %4 = tpu.iota {dimensions = array<i32: 1>} : vector<1x512xi32>
    %c15_i32 = arith.constant 15 : i32
    %5 = vector.broadcast %c15_i32 : i32 to vector<1x512xi32>
    %6 = arith.andi %4, %5 : vector<1x512xi32>
    %c4_i32 = arith.constant 4 : i32
    %7 = vector.broadcast %c4_i32 : i32 to vector<1x512xi32>
    %8 = arith.shrsi %4, %7 : vector<1x512xi32>
    %c15_i32_3 = arith.constant 15 : i32
    %9 = vector.broadcast %c15_i32_3 : i32 to vector<1x512xi32>
    %10 = arith.andi %8, %9 : vector<1x512xi32>
    %c0_i32 = arith.constant 0 : i32
    %11 = vector.broadcast %c0_i32 : i32 to vector<1x512xi32>
    %12 = arith.cmpi eq, %6, %11 : vector<1x512xi32>
    %c15_i32_4 = arith.constant 15 : i32
    %13 = vector.broadcast %c15_i32_4 : i32 to vector<1x512xi32>
    %14 = arith.cmpi eq, %6, %13 : vector<1x512xi32>
    %c0_i32_5 = arith.constant 0 : i32
    %15 = vector.broadcast %c0_i32_5 : i32 to vector<1x512xi32>
    %16 = arith.cmpi eq, %10, %15 : vector<1x512xi32>
    %c15_i32_6 = arith.constant 15 : i32
    %17 = vector.broadcast %c15_i32_6 : i32 to vector<1x512xi32>
    %18 = arith.cmpi eq, %10, %17 : vector<1x512xi32>
    %c0_7 = arith.constant 0 : index
    %c0_8 = arith.constant 0 : index
    %19 = vector.load %arg1[%c0_7, %c0_8] : memref<1x512xf32, #tpu.memory_space<vmem>>, vector<1x512xf32>
    %c0_9 = arith.constant 0 : index
    %c0_10 = arith.constant 0 : index
    %20 = vector.load %arg0[%c0_9, %c0_10] : memref<16x512xf32, #tpu.memory_space<vmem>>, vector<8x512xf32>
    %c16_i32 = arith.constant 16 : i32
    %21 = tpu.dynamic_rotate %20 by %c16_i32 dim 1 : vector<8x512xf32>, i32 -> vector<8x512xf32>
    %22 = vector.shape_cast %16 : vector<1x512xi1> to vector<1x512xi1>
    %23 = vector.broadcast %22 : vector<1x512xi1> to vector<8x512xi1>
    %24 = arith.select %23, %20, %21 : vector<8x512xi1>, vector<8x512xf32>
    %c1_i32 = arith.constant 1 : i32
    %25 = tpu.dynamic_rotate %24 by %c1_i32 dim 1 : vector<8x512xf32>, i32 -> vector<8x512xf32>
    %26 = vector.shape_cast %12 : vector<1x512xi1> to vector<1x512xi1>
    %27 = vector.broadcast %26 : vector<1x512xi1> to vector<8x512xi1>
    %28 = arith.select %27, %24, %25 : vector<8x512xi1>, vector<8x512xf32>
    %c0_11 = arith.constant 0 : index
    %c0_12 = arith.constant 0 : index
    %29 = vector.load %arg4[%c0_11, %c0_12] : memref<128x512xf32, #tpu.memory_space<vmem>>, vector<8x512xf32>
    tpu.vector_store %arg4[%c0_11, %c0_12], %28 {strides = array<i32>} : memref<128x512xf32, #tpu.memory_space<vmem>>, vector<8x512xf32>,
    %c16_i32_13 = arith.constant 16 : i32
    %30 = tpu.dynamic_rotate %20 by %c16_i32_13 dim 1 : vector<8x512xf32>, i32 -> vector<8x512xf32>
    %31 = vector.shape_cast %16 : vector<1x512xi1> to vector<1x512xi1>
    %32 = vector.broadcast %31 : vector<1x512xi1> to vector<8x512xi1>
    %33 = arith.select %32, %20, %30 : vector<8x512xi1>, vector<8x512xf32>
    %c8 = arith.constant 8 : index
    %c0_14 = arith.constant 0 : index
    %34 = vector.load %arg4[%c8, %c0_14] : memref<128x512xf32, #tpu.memory_space<vmem>>, vector<8x512xf32>
    tpu.vector_store %arg4[%c8, %c0_14], %33 {strides = array<i32>} : memref<128x512xf32, #tpu.memory_space<vmem>>, vector<8x512xf32>,
    %c16_i32_15 = arith.constant 16 : i32
    %35 = tpu.dynamic_rotate %20 by %c16_i32_15 dim 1 : vector<8x512xf32>, i32 -> vector<8x512xf32>
    %36 = vector.shape_cast %16 : vector<1x512xi1> to vector<1x512xi1>
    %37 = vector.broadcast %36 : vector<1x512xi1> to vector<8x512xi1>
    %38 = arith.select %37, %20, %35 : vector<8x512xi1>, vector<8x512xf32>
    %c511_i32 = arith.constant 511 : i32
    %39 = tpu.dynamic_rotate %38 by %c511_i32 dim 1 : vector<8x512xf32>, i32 -> vector<8x512xf32>
    %40 = vector.shape_cast %14 : vector<1x512xi1> to vector<1x512xi1>
    %41 = vector.broadcast %40 : vector<1x512xi1> to vector<8x512xi1>
    %42 = arith.select %41, %38, %39 : vector<8x512xi1>, vector<8x512xf32>
    %c16 = arith.constant 16 : index
    %c0_16 = arith.constant 0 : index
    %43 = vector.load %arg4[%c16, %c0_16] : memref<128x512xf32, #tpu.memory_space<vmem>>, vector<8x512xf32>
    tpu.vector_store %arg4[%c16, %c0_16], %42 {strides = array<i32>} : memref<128x512xf32, #tpu.memory_space<vmem>>, vector<8x512xf32>,
    %c1_i32_17 = arith.constant 1 : i32
    %44 = tpu.dynamic_rotate %20 by %c1_i32_17 dim 1 : vector<8x512xf32>, i32 -> vector<8x512xf32>
    %45 = vector.shape_cast %12 : vector<1x512xi1> to vector<1x512xi1>
    %46 = vector.broadcast %45 : vector<1x512xi1> to vector<8x512xi1>
    %47 = arith.select %46, %20, %44 : vector<8x512xi1>, vector<8x512xf32>
    %c24 = arith.constant 24 : index
    %c0_18 = arith.constant 0 : index
    %48 = vector.load %arg4[%c24, %c0_18] : memref<128x512xf32, #tpu.memory_space<vmem>>, vector<8x512xf32>
    tpu.vector_store %arg4[%c24, %c0_18], %47 {strides = array<i32>} : memref<128x512xf32, #tpu.memory_space<vmem>>, vector<8x512xf32>,
    %c32 = arith.constant 32 : index
    %c0_19 = arith.constant 0 : index
    %49 = vector.load %arg4[%c32, %c0_19] : memref<128x512xf32, #tpu.memory_space<vmem>>, vector<8x512xf32>
    tpu.vector_store %arg4[%c32, %c0_19], %20 {strides = array<i32>} : memref<128x512xf32, #tpu.memory_space<vmem>>, vector<8x512xf32>,
    %c511_i32_20 = arith.constant 511 : i32
    %50 = tpu.dynamic_rotate %20 by %c511_i32_20 dim 1 : vector<8x512xf32>, i32 -> vector<8x512xf32>
    %51 = vector.shape_cast %14 : vector<1x512xi1> to vector<1x512xi1>
    %52 = vector.broadcast %51 : vector<1x512xi1> to vector<8x512xi1>
    %53 = arith.select %52, %20, %50 : vector<8x512xi1>, vector<8x512xf32>
    %c40 = arith.constant 40 : index
    %c0_21 = arith.constant 0 : index
    %54 = vector.load %arg4[%c40, %c0_21] : memref<128x512xf32, #tpu.memory_space<vmem>>, vector<8x512xf32>
    tpu.vector_store %arg4[%c40, %c0_21], %53 {strides = array<i32>} : memref<128x512xf32, #tpu.memory_space<vmem>>, vector<8x512xf32>,
    %c496_i32 = arith.constant 496 : i32
    %55 = tpu.dynamic_rotate %20 by %c496_i32 dim 1 : vector<8x512xf32>, i32 -> vector<8x512xf32>
    %56 = vector.shape_cast %18 : vector<1x512xi1> to vector<1x512xi1>
    %57 = vector.broadcast %56 : vector<1x512xi1> to vector<8x512xi1>
    %58 = arith.select %57, %20, %55 : vector<8x512xi1>, vector<8x512xf32>
    %c1_i32_22 = arith.constant 1 : i32
    %59 = tpu.dynamic_rotate %58 by %c1_i32_22 dim 1 : vector<8x512xf32>, i32 -> vector<8x512xf32>
    %60 = vector.shape_cast %12 : vector<1x512xi1> to vector<1x512xi1>
    %61 = vector.broadcast %60 : vector<1x512xi1> to vector<8x512xi1>
    %62 = arith.select %61, %58, %59 : vector<8x512xi1>, vector<8x512xf32>
    %c48 = arith.constant 48 : index
    %c0_23 = arith.constant 0 : index
    %63 = vector.load %arg4[%c48, %c0_23] : memref<128x512xf32, #tpu.memory_space<vmem>>, vector<8x512xf32>
    tpu.vector_store %arg4[%c48, %c0_23], %62 {strides = array<i32>} : memref<128x512xf32, #tpu.memory_space<vmem>>, vector<8x512xf32>,
    %c496_i32_24 = arith.constant 496 : i32
    %64 = tpu.dynamic_rotate %20 by %c496_i32_24 dim 1 : vector<8x512xf32>, i32 -> vector<8x512xf32>
    %65 = vector.shape_cast %18 : vector<1x512xi1> to vector<1x512xi1>
    %66 = vector.broadcast %65 : vector<1x512xi1> to vector<8x512xi1>
    %67 = arith.select %66, %20, %64 : vector<8x512xi1>, vector<8x512xf32>
    %c56 = arith.constant 56 : index
    %c0_25 = arith.constant 0 : index
    %68 = vector.load %arg4[%c56, %c0_25] : memref<128x512xf32, #tpu.memory_space<vmem>>, vector<8x512xf32>
    tpu.vector_store %arg4[%c56, %c0_25], %67 {strides = array<i32>} : memref<128x512xf32, #tpu.memory_space<vmem>>, vector<8x512xf32>,
    %c496_i32_26 = arith.constant 496 : i32
    %69 = tpu.dynamic_rotate %20 by %c496_i32_26 dim 1 : vector<8x512xf32>, i32 -> vector<8x512xf32>
    %70 = vector.shape_cast %18 : vector<1x512xi1> to vector<1x512xi1>
    %71 = vector.broadcast %70 : vector<1x512xi1> to vector<8x512xi1>
    %72 = arith.select %71, %20, %69 : vector<8x512xi1>, vector<8x512xf32>
    %c511_i32_27 = arith.constant 511 : i32
    %73 = tpu.dynamic_rotate %72 by %c511_i32_27 dim 1 : vector<8x512xf32>, i32 -> vector<8x512xf32>
    %74 = vector.shape_cast %14 : vector<1x512xi1> to vector<1x512xi1>
    %75 = vector.broadcast %74 : vector<1x512xi1> to vector<8x512xi1>
    %76 = arith.select %75, %72, %73 : vector<8x512xi1>, vector<8x512xf32>
    %c64 = arith.constant 64 : index
    %c0_28 = arith.constant 0 : index
    %77 = vector.load %arg4[%c64, %c0_28] : memref<128x512xf32, #tpu.memory_space<vmem>>, vector<8x512xf32>
    tpu.vector_store %arg4[%c64, %c0_28], %76 {strides = array<i32>} : memref<128x512xf32, #tpu.memory_space<vmem>>, vector<8x512xf32>,
    %c0_29 = arith.constant 0 : index
    %c0_30 = arith.constant 0 : index
    %78 = vector.load %arg2[%c0_29, %c0_30] : memref<32x128xbf16, #tpu.memory_space<vmem>>, vector<8x128xbf16>
    %c0_31 = arith.constant 0 : index
    %c0_32 = arith.constant 0 : index
    %79 = vector.load %arg4[%c0_31, %c0_32] : memref<128x512xf32, #tpu.memory_space<vmem>>, vector<128x512xf32>
    %80 = arith.truncf %79 : vector<128x512xf32> to vector<128x512xbf16>
    %cst_33 = arith.constant dense<0.000000e+00> : vector<8x512xf32>
    %81 = tpu.matmul %78, %80, %cst_33 {dimension_numbers = #tpu.dot_dimension_numbers<[1], [0], [0], [1], [0, 0, 1, 1], [], []>} : vector<8x128xbf16>, vector<128x512xbf16>, vector<8x512xf32> -> vector<8x512xf32>
    %cst_34 = arith.constant 0.000000e+00 : f32
    %82 = vector.broadcast %cst_34 : f32 to vector<8x512xf32>
    %83 = arith.maximumf %81, %82 : vector<8x512xf32>
    %84 = vector.broadcast %19 : vector<1x512xf32> to vector<8x512xf32>
    %85 = arith.mulf %83, %84 : vector<8x512xf32>
    %c8_35 = arith.constant 8 : index
    %c0_36 = arith.constant 0 : index
    %86 = vector.load %arg0[%c8_35, %c0_36] : memref<16x512xf32, #tpu.memory_space<vmem>>, vector<8x512xf32>
    %c16_i32_37 = arith.constant 16 : i32
    %87 = tpu.dynamic_rotate %86 by %c16_i32_37 dim 1 : vector<8x512xf32>, i32 -> vector<8x512xf32>
    %88 = vector.shape_cast %16 : vector<1x512xi1> to vector<1x512xi1>
    %89 = vector.broadcast %88 : vector<1x512xi1> to vector<8x512xi1>
    %90 = arith.select %89, %86, %87 : vector<8x512xi1>, vector<8x512xf32>
    %c1_i32_38 = arith.constant 1 : i32
    %91 = tpu.dynamic_rotate %90 by %c1_i32_38 dim 1 : vector<8x512xf32>, i32 -> vector<8x512xf32>
    %92 = vector.shape_cast %12 : vector<1x512xi1> to vector<1x512xi1>
    %93 = vector.broadcast %92 : vector<1x512xi1> to vector<8x512xi1>
    %94 = arith.select %93, %90, %91 : vector<8x512xi1>, vector<8x512xf32>
    %c0_39 = arith.constant 0 : index
    %c0_40 = arith.constant 0 : index
    %95 = vector.load %arg4[%c0_39, %c0_40] : memref<128x512xf32, #tpu.memory_space<vmem>>, vector<8x512xf32>
    tpu.vector_store %arg4[%c0_39, %c0_40], %94 {strides = array<i32>} : memref<128x512xf32, #tpu.memory_space<vmem>>, vector<8x512xf32>,
    %c16_i32_41 = arith.constant 16 : i32
    %96 = tpu.dynamic_rotate %86 by %c16_i32_41 dim 1 : vector<8x512xf32>, i32 -> vector<8x512xf32>
    %97 = vector.shape_cast %16 : vector<1x512xi1> to vector<1x512xi1>
    %98 = vector.broadcast %97 : vector<1x512xi1> to vector<8x512xi1>
    %99 = arith.select %98, %86, %96 : vector<8x512xi1>, vector<8x512xf32>
    %c8_42 = arith.constant 8 : index
    %c0_43 = arith.constant 0 : index
    %100 = vector.load %arg4[%c8_42, %c0_43] : memref<128x512xf32, #tpu.memory_space<vmem>>, vector<8x512xf32>
    tpu.vector_store %arg4[%c8_42, %c0_43], %99 {strides = array<i32>} : memref<128x512xf32, #tpu.memory_space<vmem>>, vector<8x512xf32>,
    %c16_i32_44 = arith.constant 16 : i32
    %101 = tpu.dynamic_rotate %86 by %c16_i32_44 dim 1 : vector<8x512xf32>, i32 -> vector<8x512xf32>
    %102 = vector.shape_cast %16 : vector<1x512xi1> to vector<1x512xi1>
    %103 = vector.broadcast %102 : vector<1x512xi1> to vector<8x512xi1>
    %104 = arith.select %103, %86, %101 : vector<8x512xi1>, vector<8x512xf32>
    %c511_i32_45 = arith.constant 511 : i32
    %105 = tpu.dynamic_rotate %104 by %c511_i32_45 dim 1 : vector<8x512xf32>, i32 -> vector<8x512xf32>
    %106 = vector.shape_cast %14 : vector<1x512xi1> to vector<1x512xi1>
    %107 = vector.broadcast %106 : vector<1x512xi1> to vector<8x512xi1>
    %108 = arith.select %107, %104, %105 : vector<8x512xi1>, vector<8x512xf32>
    %c16_46 = arith.constant 16 : index
    %c0_47 = arith.constant 0 : index
    %109 = vector.load %arg4[%c16_46, %c0_47] : memref<128x512xf32, #tpu.memory_space<vmem>>, vector<8x512xf32>
    tpu.vector_store %arg4[%c16_46, %c0_47], %108 {strides = array<i32>} : memref<128x512xf32, #tpu.memory_space<vmem>>, vector<8x512xf32>,
    %c1_i32_48 = arith.constant 1 : i32
    %110 = tpu.dynamic_rotate %86 by %c1_i32_48 dim 1 : vector<8x512xf32>, i32 -> vector<8x512xf32>
    %111 = vector.shape_cast %12 : vector<1x512xi1> to vector<1x512xi1>
    %112 = vector.broadcast %111 : vector<1x512xi1> to vector<8x512xi1>
    %113 = arith.select %112, %86, %110 : vector<8x512xi1>, vector<8x512xf32>
    %c24_49 = arith.constant 24 : index
    %c0_50 = arith.constant 0 : index
    %114 = vector.load %arg4[%c24_49, %c0_50] : memref<128x512xf32, #tpu.memory_space<vmem>>, vector<8x512xf32>
    tpu.vector_store %arg4[%c24_49, %c0_50], %113 {strides = array<i32>} : memref<128x512xf32, #tpu.memory_space<vmem>>, vector<8x512xf32>,
    %c32_51 = arith.constant 32 : index
    %c0_52 = arith.constant 0 : index
    %115 = vector.load %arg4[%c32_51, %c0_52] : memref<128x512xf32, #tpu.memory_space<vmem>>, vector<8x512xf32>
    tpu.vector_store %arg4[%c32_51, %c0_52], %86 {strides = array<i32>} : memref<128x512xf32, #tpu.memory_space<vmem>>, vector<8x512xf32>,
    %c511_i32_53 = arith.constant 511 : i32
    %116 = tpu.dynamic_rotate %86 by %c511_i32_53 dim 1 : vector<8x512xf32>, i32 -> vector<8x512xf32>
    %117 = vector.shape_cast %14 : vector<1x512xi1> to vector<1x512xi1>
    %118 = vector.broadcast %117 : vector<1x512xi1> to vector<8x512xi1>
    %119 = arith.select %118, %86, %116 : vector<8x512xi1>, vector<8x512xf32>
    %c40_54 = arith.constant 40 : index
    %c0_55 = arith.constant 0 : index
    %120 = vector.load %arg4[%c40_54, %c0_55] : memref<128x512xf32, #tpu.memory_space<vmem>>, vector<8x512xf32>
    tpu.vector_store %arg4[%c40_54, %c0_55], %119 {strides = array<i32>} : memref<128x512xf32, #tpu.memory_space<vmem>>, vector<8x512xf32>,
    %c496_i32_56 = arith.constant 496 : i32
    %121 = tpu.dynamic_rotate %86 by %c496_i32_56 dim 1 : vector<8x512xf32>, i32 -> vector<8x512xf32>
    %122 = vector.shape_cast %18 : vector<1x512xi1> to vector<1x512xi1>
    %123 = vector.broadcast %122 : vector<1x512xi1> to vector<8x512xi1>
    %124 = arith.select %123, %86, %121 : vector<8x512xi1>, vector<8x512xf32>
    %c1_i32_57 = arith.constant 1 : i32
    %125 = tpu.dynamic_rotate %124 by %c1_i32_57 dim 1 : vector<8x512xf32>, i32 -> vector<8x512xf32>
    %126 = vector.shape_cast %12 : vector<1x512xi1> to vector<1x512xi1>
    %127 = vector.broadcast %126 : vector<1x512xi1> to vector<8x512xi1>
    %128 = arith.select %127, %124, %125 : vector<8x512xi1>, vector<8x512xf32>
    %c48_58 = arith.constant 48 : index
    %c0_59 = arith.constant 0 : index
    %129 = vector.load %arg4[%c48_58, %c0_59] : memref<128x512xf32, #tpu.memory_space<vmem>>, vector<8x512xf32>
    tpu.vector_store %arg4[%c48_58, %c0_59], %128 {strides = array<i32>} : memref<128x512xf32, #tpu.memory_space<vmem>>, vector<8x512xf32>,
    %c496_i32_60 = arith.constant 496 : i32
    %130 = tpu.dynamic_rotate %86 by %c496_i32_60 dim 1 : vector<8x512xf32>, i32 -> vector<8x512xf32>
    %131 = vector.shape_cast %18 : vector<1x512xi1> to vector<1x512xi1>
    %132 = vector.broadcast %131 : vector<1x512xi1> to vector<8x512xi1>
    %133 = arith.select %132, %86, %130 : vector<8x512xi1>, vector<8x512xf32>
    %c56_61 = arith.constant 56 : index
    %c0_62 = arith.constant 0 : index
    %134 = vector.load %arg4[%c56_61, %c0_62] : memref<128x512xf32, #tpu.memory_space<vmem>>, vector<8x512xf32>
    tpu.vector_store %arg4[%c56_61, %c0_62], %133 {strides = array<i32>} : memref<128x512xf32, #tpu.memory_space<vmem>>, vector<8x512xf32>,
    %c496_i32_63 = arith.constant 496 : i32
    %135 = tpu.dynamic_rotate %86 by %c496_i32_63 dim 1 : vector<8x512xf32>, i32 -> vector<8x512xf32>
    %136 = vector.shape_cast %18 : vector<1x512xi1> to vector<1x512xi1>
    %137 = vector.broadcast %136 : vector<1x512xi1> to vector<8x512xi1>
    %138 = arith.select %137, %86, %135 : vector<8x512xi1>, vector<8x512xf32>
    %c511_i32_64 = arith.constant 511 : i32
    %139 = tpu.dynamic_rotate %138 by %c511_i32_64 dim 1 : vector<8x512xf32>, i32 -> vector<8x512xf32>
    %140 = vector.shape_cast %14 : vector<1x512xi1> to vector<1x512xi1>
    %141 = vector.broadcast %140 : vector<1x512xi1> to vector<8x512xi1>
    %142 = arith.select %141, %138, %139 : vector<8x512xi1>, vector<8x512xf32>
    %c64_65 = arith.constant 64 : index
    %c0_66 = arith.constant 0 : index
    %143 = vector.load %arg4[%c64_65, %c0_66] : memref<128x512xf32, #tpu.memory_space<vmem>>, vector<8x512xf32>
    tpu.vector_store %arg4[%c64_65, %c0_66], %142 {strides = array<i32>} : memref<128x512xf32, #tpu.memory_space<vmem>>, vector<8x512xf32>,
    %c8_67 = arith.constant 8 : index
    %c0_68 = arith.constant 0 : index
    %144 = vector.load %arg2[%c8_67, %c0_68] : memref<32x128xbf16, #tpu.memory_space<vmem>>, vector<8x128xbf16>
    %c0_69 = arith.constant 0 : index
    %c0_70 = arith.constant 0 : index
    %145 = vector.load %arg4[%c0_69, %c0_70] : memref<128x512xf32, #tpu.memory_space<vmem>>, vector<128x512xf32>
    %146 = arith.truncf %145 : vector<128x512xf32> to vector<128x512xbf16>
    %cst_71 = arith.constant dense<0.000000e+00> : vector<8x512xf32>
    %147 = tpu.matmul %144, %146, %cst_71 {dimension_numbers = #tpu.dot_dimension_numbers<[1], [0], [0], [1], [0, 0, 1, 1], [], []>} : vector<8x128xbf16>, vector<128x512xbf16>, vector<8x512xf32> -> vector<8x512xf32>
    %cst_72 = arith.constant 0.000000e+00 : f32
    %148 = vector.broadcast %cst_72 : f32 to vector<8x512xf32>
    %149 = arith.maximumf %147, %148 : vector<8x512xf32>
    %150 = vector.broadcast %19 : vector<1x512xf32> to vector<8x512xf32>
    %151 = arith.mulf %149, %150 : vector<8x512xf32>
    %152 = arith.addf %85, %151 : vector<8x512xf32>
    %c16_i32_73 = arith.constant 16 : i32
    %153 = tpu.dynamic_rotate %152 by %c16_i32_73 dim 1 : vector<8x512xf32>, i32 -> vector<8x512xf32>
    %154 = vector.shape_cast %16 : vector<1x512xi1> to vector<1x512xi1>
    %155 = vector.broadcast %154 : vector<1x512xi1> to vector<8x512xi1>
    %156 = arith.select %155, %152, %153 : vector<8x512xi1>, vector<8x512xf32>
    %c1_i32_74 = arith.constant 1 : i32
    %157 = tpu.dynamic_rotate %156 by %c1_i32_74 dim 1 : vector<8x512xf32>, i32 -> vector<8x512xf32>
    %158 = vector.shape_cast %12 : vector<1x512xi1> to vector<1x512xi1>
    %159 = vector.broadcast %158 : vector<1x512xi1> to vector<8x512xi1>
    %160 = arith.select %159, %156, %157 : vector<8x512xi1>, vector<8x512xf32>
    %c0_75 = arith.constant 0 : index
    %c0_76 = arith.constant 0 : index
    %161 = vector.load %arg4[%c0_75, %c0_76] : memref<128x512xf32, #tpu.memory_space<vmem>>, vector<8x512xf32>
    tpu.vector_store %arg4[%c0_75, %c0_76], %160 {strides = array<i32>} : memref<128x512xf32, #tpu.memory_space<vmem>>, vector<8x512xf32>,
    %c16_i32_77 = arith.constant 16 : i32
    %162 = tpu.dynamic_rotate %152 by %c16_i32_77 dim 1 : vector<8x512xf32>, i32 -> vector<8x512xf32>
    %163 = vector.shape_cast %16 : vector<1x512xi1> to vector<1x512xi1>
    %164 = vector.broadcast %163 : vector<1x512xi1> to vector<8x512xi1>
    %165 = arith.select %164, %152, %162 : vector<8x512xi1>, vector<8x512xf32>
    %c8_78 = arith.constant 8 : index
    %c0_79 = arith.constant 0 : index
    %166 = vector.load %arg4[%c8_78, %c0_79] : memref<128x512xf32, #tpu.memory_space<vmem>>, vector<8x512xf32>
    tpu.vector_store %arg4[%c8_78, %c0_79], %165 {strides = array<i32>} : memref<128x512xf32, #tpu.memory_space<vmem>>, vector<8x512xf32>,
    %c16_i32_80 = arith.constant 16 : i32
    %167 = tpu.dynamic_rotate %152 by %c16_i32_80 dim 1 : vector<8x512xf32>, i32 -> vector<8x512xf32>
    %168 = vector.shape_cast %16 : vector<1x512xi1> to vector<1x512xi1>
    %169 = vector.broadcast %168 : vector<1x512xi1> to vector<8x512xi1>
    %170 = arith.select %169, %152, %167 : vector<8x512xi1>, vector<8x512xf32>
    %c511_i32_81 = arith.constant 511 : i32
    %171 = tpu.dynamic_rotate %170 by %c511_i32_81 dim 1 : vector<8x512xf32>, i32 -> vector<8x512xf32>
    %172 = vector.shape_cast %14 : vector<1x512xi1> to vector<1x512xi1>
    %173 = vector.broadcast %172 : vector<1x512xi1> to vector<8x512xi1>
    %174 = arith.select %173, %170, %171 : vector<8x512xi1>, vector<8x512xf32>
    %c16_82 = arith.constant 16 : index
    %c0_83 = arith.constant 0 : index
    %175 = vector.load %arg4[%c16_82, %c0_83] : memref<128x512xf32, #tpu.memory_space<vmem>>, vector<8x512xf32>
    tpu.vector_store %arg4[%c16_82, %c0_83], %174 {strides = array<i32>} : memref<128x512xf32, #tpu.memory_space<vmem>>, vector<8x512xf32>,
    %c1_i32_84 = arith.constant 1 : i32
    %176 = tpu.dynamic_rotate %152 by %c1_i32_84 dim 1 : vector<8x512xf32>, i32 -> vector<8x512xf32>
    %177 = vector.shape_cast %12 : vector<1x512xi1> to vector<1x512xi1>
    %178 = vector.broadcast %177 : vector<1x512xi1> to vector<8x512xi1>
    %179 = arith.select %178, %152, %176 : vector<8x512xi1>, vector<8x512xf32>
    %c24_85 = arith.constant 24 : index
    %c0_86 = arith.constant 0 : index
    %180 = vector.load %arg4[%c24_85, %c0_86] : memref<128x512xf32, #tpu.memory_space<vmem>>, vector<8x512xf32>
    tpu.vector_store %arg4[%c24_85, %c0_86], %179 {strides = array<i32>} : memref<128x512xf32, #tpu.memory_space<vmem>>, vector<8x512xf32>,
    %c32_87 = arith.constant 32 : index
    %c0_88 = arith.constant 0 : index
    %181 = vector.load %arg4[%c32_87, %c0_88] : memref<128x512xf32, #tpu.memory_space<vmem>>, vector<8x512xf32>
    tpu.vector_store %arg4[%c32_87, %c0_88], %152 {strides = array<i32>} : memref<128x512xf32, #tpu.memory_space<vmem>>, vector<8x512xf32>,
    %c511_i32_89 = arith.constant 511 : i32
    %182 = tpu.dynamic_rotate %152 by %c511_i32_89 dim 1 : vector<8x512xf32>, i32 -> vector<8x512xf32>
    %183 = vector.shape_cast %14 : vector<1x512xi1> to vector<1x512xi1>
    %184 = vector.broadcast %183 : vector<1x512xi1> to vector<8x512xi1>
    %185 = arith.select %184, %152, %182 : vector<8x512xi1>, vector<8x512xf32>
    %c40_90 = arith.constant 40 : index
    %c0_91 = arith.constant 0 : index
    %186 = vector.load %arg4[%c40_90, %c0_91] : memref<128x512xf32, #tpu.memory_space<vmem>>, vector<8x512xf32>
    tpu.vector_store %arg4[%c40_90, %c0_91], %185 {strides = array<i32>} : memref<128x512xf32, #tpu.memory_space<vmem>>, vector<8x512xf32>,
    %c496_i32_92 = arith.constant 496 : i32
    %187 = tpu.dynamic_rotate %152 by %c496_i32_92 dim 1 : vector<8x512xf32>, i32 -> vector<8x512xf32>
    %188 = vector.shape_cast %18 : vector<1x512xi1> to vector<1x512xi1>
    %189 = vector.broadcast %188 : vector<1x512xi1> to vector<8x512xi1>
    %190 = arith.select %189, %152, %187 : vector<8x512xi1>, vector<8x512xf32>
    %c1_i32_93 = arith.constant 1 : i32
    %191 = tpu.dynamic_rotate %190 by %c1_i32_93 dim 1 : vector<8x512xf32>, i32 -> vector<8x512xf32>
    %192 = vector.shape_cast %12 : vector<1x512xi1> to vector<1x512xi1>
    %193 = vector.broadcast %192 : vector<1x512xi1> to vector<8x512xi1>
    %194 = arith.select %193, %190, %191 : vector<8x512xi1>, vector<8x512xf32>
    %c48_94 = arith.constant 48 : index
    %c0_95 = arith.constant 0 : index
    %195 = vector.load %arg4[%c48_94, %c0_95] : memref<128x512xf32, #tpu.memory_space<vmem>>, vector<8x512xf32>
    tpu.vector_store %arg4[%c48_94, %c0_95], %194 {strides = array<i32>} : memref<128x512xf32, #tpu.memory_space<vmem>>, vector<8x512xf32>,
    %c496_i32_96 = arith.constant 496 : i32
    %196 = tpu.dynamic_rotate %152 by %c496_i32_96 dim 1 : vector<8x512xf32>, i32 -> vector<8x512xf32>
    %197 = vector.shape_cast %18 : vector<1x512xi1> to vector<1x512xi1>
    %198 = vector.broadcast %197 : vector<1x512xi1> to vector<8x512xi1>
    %199 = arith.select %198, %152, %196 : vector<8x512xi1>, vector<8x512xf32>
    %c56_97 = arith.constant 56 : index
    %c0_98 = arith.constant 0 : index
    %200 = vector.load %arg4[%c56_97, %c0_98] : memref<128x512xf32, #tpu.memory_space<vmem>>, vector<8x512xf32>
    tpu.vector_store %arg4[%c56_97, %c0_98], %199 {strides = array<i32>} : memref<128x512xf32, #tpu.memory_space<vmem>>, vector<8x512xf32>,
    %c496_i32_99 = arith.constant 496 : i32
    %201 = tpu.dynamic_rotate %152 by %c496_i32_99 dim 1 : vector<8x512xf32>, i32 -> vector<8x512xf32>
    %202 = vector.shape_cast %18 : vector<1x512xi1> to vector<1x512xi1>
    %203 = vector.broadcast %202 : vector<1x512xi1> to vector<8x512xi1>
    %204 = arith.select %203, %152, %201 : vector<8x512xi1>, vector<8x512xf32>
    %c511_i32_100 = arith.constant 511 : i32
    %205 = tpu.dynamic_rotate %204 by %c511_i32_100 dim 1 : vector<8x512xf32>, i32 -> vector<8x512xf32>
    %206 = vector.shape_cast %14 : vector<1x512xi1> to vector<1x512xi1>
    %207 = vector.broadcast %206 : vector<1x512xi1> to vector<8x512xi1>
    %208 = arith.select %207, %204, %205 : vector<8x512xi1>, vector<8x512xf32>
    %c64_101 = arith.constant 64 : index
    %c0_102 = arith.constant 0 : index
    %209 = vector.load %arg4[%c64_101, %c0_102] : memref<128x512xf32, #tpu.memory_space<vmem>>, vector<8x512xf32>
    tpu.vector_store %arg4[%c64_101, %c0_102], %208 {strides = array<i32>} : memref<128x512xf32, #tpu.memory_space<vmem>>, vector<8x512xf32>,
    %c16_103 = arith.constant 16 : index
    %c0_104 = arith.constant 0 : index
    %210 = vector.load %arg2[%c16_103, %c0_104] : memref<32x128xbf16, #tpu.memory_space<vmem>>, vector<8x128xbf16>
    %c0_105 = arith.constant 0 : index
    %c0_106 = arith.constant 0 : index
    %211 = vector.load %arg4[%c0_105, %c0_106] : memref<128x512xf32, #tpu.memory_space<vmem>>, vector<128x512xf32>
    %212 = arith.truncf %211 : vector<128x512xf32> to vector<128x512xbf16>
    %cst_107 = arith.constant dense<0.000000e+00> : vector<8x512xf32>
    %213 = tpu.matmul %210, %212, %cst_107 {dimension_numbers = #tpu.dot_dimension_numbers<[1], [0], [0], [1], [0, 0, 1, 1], [], []>} : vector<8x128xbf16>, vector<128x512xbf16>, vector<8x512xf32> -> vector<8x512xf32>
    %cst_108 = arith.constant 0.000000e+00 : f32
    %214 = vector.broadcast %cst_108 : f32 to vector<8x512xf32>
    %215 = arith.maximumf %213, %214 : vector<8x512xf32>
    %216 = vector.broadcast %19 : vector<1x512xf32> to vector<8x512xf32>
    %217 = arith.mulf %215, %216 : vector<8x512xf32>
    %c16_i32_109 = arith.constant 16 : i32
    %218 = tpu.dynamic_rotate %217 by %c16_i32_109 dim 1 : vector<8x512xf32>, i32 -> vector<8x512xf32>
    %219 = vector.shape_cast %16 : vector<1x512xi1> to vector<1x512xi1>
    %220 = vector.broadcast %219 : vector<1x512xi1> to vector<8x512xi1>
    %221 = arith.select %220, %217, %218 : vector<8x512xi1>, vector<8x512xf32>
    %c1_i32_110 = arith.constant 1 : i32
    %222 = tpu.dynamic_rotate %221 by %c1_i32_110 dim 1 : vector<8x512xf32>, i32 -> vector<8x512xf32>
    %223 = vector.shape_cast %12 : vector<1x512xi1> to vector<1x512xi1>
    %224 = vector.broadcast %223 : vector<1x512xi1> to vector<8x512xi1>
    %225 = arith.select %224, %221, %222 : vector<8x512xi1>, vector<8x512xf32>
    %c0_111 = arith.constant 0 : index
    %c0_112 = arith.constant 0 : index
    %226 = vector.load %arg4[%c0_111, %c0_112] : memref<128x512xf32, #tpu.memory_space<vmem>>, vector<8x512xf32>
    tpu.vector_store %arg4[%c0_111, %c0_112], %225 {strides = array<i32>} : memref<128x512xf32, #tpu.memory_space<vmem>>, vector<8x512xf32>,
    %c16_i32_113 = arith.constant 16 : i32
    %227 = tpu.dynamic_rotate %217 by %c16_i32_113 dim 1 : vector<8x512xf32>, i32 -> vector<8x512xf32>
    %228 = vector.shape_cast %16 : vector<1x512xi1> to vector<1x512xi1>
    %229 = vector.broadcast %228 : vector<1x512xi1> to vector<8x512xi1>
    %230 = arith.select %229, %217, %227 : vector<8x512xi1>, vector<8x512xf32>
    %c8_114 = arith.constant 8 : index
    %c0_115 = arith.constant 0 : index
    %231 = vector.load %arg4[%c8_114, %c0_115] : memref<128x512xf32, #tpu.memory_space<vmem>>, vector<8x512xf32>
    tpu.vector_store %arg4[%c8_114, %c0_115], %230 {strides = array<i32>} : memref<128x512xf32, #tpu.memory_space<vmem>>, vector<8x512xf32>,
    %c16_i32_116 = arith.constant 16 : i32
    %232 = tpu.dynamic_rotate %217 by %c16_i32_116 dim 1 : vector<8x512xf32>, i32 -> vector<8x512xf32>
    %233 = vector.shape_cast %16 : vector<1x512xi1> to vector<1x512xi1>
    %234 = vector.broadcast %233 : vector<1x512xi1> to vector<8x512xi1>
    %235 = arith.select %234, %217, %232 : vector<8x512xi1>, vector<8x512xf32>
    %c511_i32_117 = arith.constant 511 : i32
    %236 = tpu.dynamic_rotate %235 by %c511_i32_117 dim 1 : vector<8x512xf32>, i32 -> vector<8x512xf32>
    %237 = vector.shape_cast %14 : vector<1x512xi1> to vector<1x512xi1>
    %238 = vector.broadcast %237 : vector<1x512xi1> to vector<8x512xi1>
    %239 = arith.select %238, %235, %236 : vector<8x512xi1>, vector<8x512xf32>
    %c16_118 = arith.constant 16 : index
    %c0_119 = arith.constant 0 : index
    %240 = vector.load %arg4[%c16_118, %c0_119] : memref<128x512xf32, #tpu.memory_space<vmem>>, vector<8x512xf32>
    tpu.vector_store %arg4[%c16_118, %c0_119], %239 {strides = array<i32>} : memref<128x512xf32, #tpu.memory_space<vmem>>, vector<8x512xf32>,
    %c1_i32_120 = arith.constant 1 : i32
    %241 = tpu.dynamic_rotate %217 by %c1_i32_120 dim 1 : vector<8x512xf32>, i32 -> vector<8x512xf32>
    %242 = vector.shape_cast %12 : vector<1x512xi1> to vector<1x512xi1>
    %243 = vector.broadcast %242 : vector<1x512xi1> to vector<8x512xi1>
    %244 = arith.select %243, %217, %241 : vector<8x512xi1>, vector<8x512xf32>
    %c24_121 = arith.constant 24 : index
    %c0_122 = arith.constant 0 : index
    %245 = vector.load %arg4[%c24_121, %c0_122] : memref<128x512xf32, #tpu.memory_space<vmem>>, vector<8x512xf32>
    tpu.vector_store %arg4[%c24_121, %c0_122], %244 {strides = array<i32>} : memref<128x512xf32, #tpu.memory_space<vmem>>, vector<8x512xf32>,
    %c32_123 = arith.constant 32 : index
    %c0_124 = arith.constant 0 : index
    %246 = vector.load %arg4[%c32_123, %c0_124] : memref<128x512xf32, #tpu.memory_space<vmem>>, vector<8x512xf32>
    tpu.vector_store %arg4[%c32_123, %c0_124], %217 {strides = array<i32>} : memref<128x512xf32, #tpu.memory_space<vmem>>, vector<8x512xf32>,
    %c511_i32_125 = arith.constant 511 : i32
    %247 = tpu.dynamic_rotate %217 by %c511_i32_125 dim 1 : vector<8x512xf32>, i32 -> vector<8x512xf32>
    %248 = vector.shape_cast %14 : vector<1x512xi1> to vector<1x512xi1>
    %249 = vector.broadcast %248 : vector<1x512xi1> to vector<8x512xi1>
    %250 = arith.select %249, %217, %247 : vector<8x512xi1>, vector<8x512xf32>
    %c40_126 = arith.constant 40 : index
    %c0_127 = arith.constant 0 : index
    %251 = vector.load %arg4[%c40_126, %c0_127] : memref<128x512xf32, #tpu.memory_space<vmem>>, vector<8x512xf32>
    tpu.vector_store %arg4[%c40_126, %c0_127], %250 {strides = array<i32>} : memref<128x512xf32, #tpu.memory_space<vmem>>, vector<8x512xf32>,
    %c496_i32_128 = arith.constant 496 : i32
    %252 = tpu.dynamic_rotate %217 by %c496_i32_128 dim 1 : vector<8x512xf32>, i32 -> vector<8x512xf32>
    %253 = vector.shape_cast %18 : vector<1x512xi1> to vector<1x512xi1>
    %254 = vector.broadcast %253 : vector<1x512xi1> to vector<8x512xi1>
    %255 = arith.select %254, %217, %252 : vector<8x512xi1>, vector<8x512xf32>
    %c1_i32_129 = arith.constant 1 : i32
    %256 = tpu.dynamic_rotate %255 by %c1_i32_129 dim 1 : vector<8x512xf32>, i32 -> vector<8x512xf32>
    %257 = vector.shape_cast %12 : vector<1x512xi1> to vector<1x512xi1>
    %258 = vector.broadcast %257 : vector<1x512xi1> to vector<8x512xi1>
    %259 = arith.select %258, %255, %256 : vector<8x512xi1>, vector<8x512xf32>
    %c48_130 = arith.constant 48 : index
    %c0_131 = arith.constant 0 : index
    %260 = vector.load %arg4[%c48_130, %c0_131] : memref<128x512xf32, #tpu.memory_space<vmem>>, vector<8x512xf32>
    tpu.vector_store %arg4[%c48_130, %c0_131], %259 {strides = array<i32>} : memref<128x512xf32, #tpu.memory_space<vmem>>, vector<8x512xf32>,
    %c496_i32_132 = arith.constant 496 : i32
    %261 = tpu.dynamic_rotate %217 by %c496_i32_132 dim 1 : vector<8x512xf32>, i32 -> vector<8x512xf32>
    %262 = vector.shape_cast %18 : vector<1x512xi1> to vector<1x512xi1>
    %263 = vector.broadcast %262 : vector<1x512xi1> to vector<8x512xi1>
    %264 = arith.select %263, %217, %261 : vector<8x512xi1>, vector<8x512xf32>
    %c56_133 = arith.constant 56 : index
    %c0_134 = arith.constant 0 : index
    %265 = vector.load %arg4[%c56_133, %c0_134] : memref<128x512xf32, #tpu.memory_space<vmem>>, vector<8x512xf32>
    tpu.vector_store %arg4[%c56_133, %c0_134], %264 {strides = array<i32>} : memref<128x512xf32, #tpu.memory_space<vmem>>, vector<8x512xf32>,
    %c496_i32_135 = arith.constant 496 : i32
    %266 = tpu.dynamic_rotate %217 by %c496_i32_135 dim 1 : vector<8x512xf32>, i32 -> vector<8x512xf32>
    %267 = vector.shape_cast %18 : vector<1x512xi1> to vector<1x512xi1>
    %268 = vector.broadcast %267 : vector<1x512xi1> to vector<8x512xi1>
    %269 = arith.select %268, %217, %266 : vector<8x512xi1>, vector<8x512xf32>
    %c511_i32_136 = arith.constant 511 : i32
    %270 = tpu.dynamic_rotate %269 by %c511_i32_136 dim 1 : vector<8x512xf32>, i32 -> vector<8x512xf32>
    %271 = vector.shape_cast %14 : vector<1x512xi1> to vector<1x512xi1>
    %272 = vector.broadcast %271 : vector<1x512xi1> to vector<8x512xi1>
    %273 = arith.select %272, %269, %270 : vector<8x512xi1>, vector<8x512xf32>
    %c64_137 = arith.constant 64 : index
    %c0_138 = arith.constant 0 : index
    %274 = vector.load %arg4[%c64_137, %c0_138] : memref<128x512xf32, #tpu.memory_space<vmem>>, vector<8x512xf32>
    tpu.vector_store %arg4[%c64_137, %c0_138], %273 {strides = array<i32>} : memref<128x512xf32, #tpu.memory_space<vmem>>, vector<8x512xf32>,
    %c24_139 = arith.constant 24 : index
    %c0_140 = arith.constant 0 : index
    %275 = vector.load %arg2[%c24_139, %c0_140] : memref<32x128xbf16, #tpu.memory_space<vmem>>, vector<8x128xbf16>
    %c0_141 = arith.constant 0 : index
    %c0_142 = arith.constant 0 : index
    %276 = vector.load %arg4[%c0_141, %c0_142] : memref<128x512xf32, #tpu.memory_space<vmem>>, vector<128x512xf32>
    %277 = arith.truncf %276 : vector<128x512xf32> to vector<128x512xbf16>
    %cst_143 = arith.constant dense<0.000000e+00> : vector<8x512xf32>
    %278 = tpu.matmul %275, %277, %cst_143 {dimension_numbers = #tpu.dot_dimension_numbers<[1], [0], [0], [1], [0, 0, 1, 1], [], []>} : vector<8x128xbf16>, vector<128x512xbf16>, vector<8x512xf32> -> vector<8x512xf32>
    %279 = vector.broadcast %19 : vector<1x512xf32> to vector<8x512xf32>
    %280 = arith.mulf %278, %279 : vector<8x512xf32>
    %281 = vector.extract_strided_slice %280 {offsets = [0, 0], sizes = [1, 512], strides = [1, 1]} : vector<8x512xf32> to vector<1x512xf32>
    %282 = arith.negf %281 : vector<1x512xf32>
    %283 = math.exp %282 : vector<1x512xf32>
    %cst_144 = arith.constant 1.000000e+00 : f32
    %284 = vector.broadcast %cst_144 : f32 to vector<1x512xf32>
    %285 = arith.addf %284, %283 : vector<1x512xf32>
    %286 = arith.divf %284, %285 : vector<1x512xf32>
    %287 = arith.mulf %286, %19 : vector<1x512xf32>
    %c0_145 = arith.constant 0 : index
    %c0_146 = arith.constant 0 : index
    %288 = vector.load %arg3[%c0_145, %c0_146] : memref<1x512xf32, #tpu.memory_space<vmem>>, vector<1x512xf32>
    tpu.vector_store %arg3[%c0_145, %c0_146], %287 {strides = array<i32>} : memref<1x512xf32, #tpu.memory_space<vmem>>, vector<1x512xf32>,
    return
  }
}

</mosaic_0001>

<llo_original>
// kernel: tpu_custom_call.1
$region0: #{tpu_custom_call.1}
  #allocation0 [shape = 'u32[]', space=smem, size = 0x4, offset = 0x4, fixed_abs, tag = 'smem constant byte address 0x4 - core index']
  #allocation1 [shape = 'u32[144,128]{1,0:T(1,128)}', space=vmem, size = 0x12000, scoped, tag = 'internal scratch']
  #allocation2 [shape = 'f32[128,512]{1,0:T(8,128)}', space=vmem, size = 0x40000, scoped, tag = 'scratch operand']
  %s0 = inlined_call_operand.hbm [shape: f32[16,512], index: 0, kind: input, shape index: {}]
  %s1 = inlined_call_operand.hbm [shape: f32[1,512], index: 1, kind: input, shape index: {}]
  %s2 = inlined_call_operand.hbm [shape: bf16[32,128], index: 2, kind: input, shape index: {}]
  %s3 = inlined_call_operand.hbm [shape: f32[1,512], index: 3, kind: output, shape index: {}]
  %s4 = sld [smem:[#allocation0]]
  $region34: #{tpu_custom_call.1} parent=0
    _
  %s6 = ssub.s32 1, %s4
  %s7 = scalar_select 0, %s6, %s4
  $region1: #{tpu_custom_call.1} parent=0
    #allocation3 [shape = 'u8[32768]{0}', space=vmem, size = 0x8000, scoped, tag = 'input window, operand 0, single buffered']
    #allocation4 [shape = 's32[1]{0}', space=sflag, size = 0x4, scoped, tag = 'scoped memory for tpu_custom_call.1']
    #allocation5 [shape = 's32[1]{0}', space=sflag, size = 0x4, scoped, tag = 'scoped memory for tpu_custom_call.1']
    #allocation6 [shape = 'u8[2048]{0}', space=vmem, size = 0x800, scoped, tag = 'input window, operand 1, single buffered']
    #allocation7 [shape = 's32[1]{0}', space=sflag, size = 0x4, scoped, tag = 'scoped memory for tpu_custom_call.1']
    #allocation8 [shape = 'u8[8192]{0}', space=vmem, size = 0x2000, scoped, tag = 'input window, operand 2, single buffered']
    #allocation9 [shape = 'u8[2048]{0}', space=vmem, size = 0x800, scoped, tag = 'output window, operand 0, single buffered']
    %8 = vsyncpa [#allocation4], 0
    %9 = vsyncpa [#allocation7], 0
    %10 = vsyncpa [#allocation5], 0
    // Predicated region
    $region2: #{tpu_custom_call.1} parent=1 // pred_check
      _
    $region3: #{tpu_custom_call.1} parent=1 // pred_check_branch
      %12 = sbr.rel (0) target = $region5
    $region4: #{tpu_custom_call.1} parent=1 // pred_region
      %s14 = ssub.s32 1024, 1024
      %15 = vsyncadd [#allocation4], %s14
      %s16 = sshll.u32 [#allocation3], 4
      %s17 = int_to_ptr.vmem [resolvable:$true] %s16
      %22 = dma.hbm_to_vmem [thread:$0]  %s0, 1024, %s17, [#allocation4], 512, 512, 32
    $region5: #{tpu_custom_call.1} parent=1 // pred_fallthru
      _
    // Predicated region
    $region6: #{tpu_custom_call.1} parent=1 // pred_check
      _
    $region7: #{tpu_custom_call.1} parent=1 // pred_check_branch
      %24 = sbr.rel (0) target = $region9
    $region8: #{tpu_custom_call.1} parent=1 // pred_region
      %s26 = ssub.s32 64, 64
      %27 = vsyncadd [#allocation7], %s26
      %s29 = sshll.u32 [#allocation6], 4
      %s30 = int_to_ptr.vmem [resolvable:$true] %s29
      %32 = dma.hbm_to_vmem [thread:$0]  %s1, 64, %s30, [#allocation7]
    $region9: #{tpu_custom_call.1} parent=1 // pred_fallthru
      _
    // Predicated region
    $region10: #{tpu_custom_call.1} parent=1 // pred_check
      _
    $region11: #{tpu_custom_call.1} parent=1 // pred_check_branch
      %34 = sbr.rel (0) target = $region13
    $region12: #{tpu_custom_call.1} parent=1 // pred_region
      %s36 = ssub.s32 256, 256
      %37 = vsyncadd [#allocation7], %s36
      %s38 = sshll.u32 [#allocation8], 4
      %s39 = int_to_ptr.vmem [resolvable:$true] %s38
      %44 = dma.hbm_to_vmem [thread:$0]  %s2, 256, %s39, [#allocation7], 64, 64, 4
    $region13: #{tpu_custom_call.1} parent=1 // pred_fallthru
      _
    // Predicated region
    $region14: #{tpu_custom_call.1} parent=1 // pred_check
      _
    $region15: #{tpu_custom_call.1} parent=1 // pred_check_branch
      %46 = sbr.rel (0) target = $region17
    $region16: #{tpu_custom_call.1} parent=1 // pred_region
      %47 = dma.done [#allocation4], 1024
    $region17: #{tpu_custom_call.1} parent=1 // pred_fallthru
      _
    // Predicated region
    $region18: #{tpu_custom_call.1} parent=1 // pred_check
      _
    $region19: #{tpu_custom_call.1} parent=1 // pred_check_branch
      %49 = sbr.rel (0) target = $region21
    $region20: #{tpu_custom_call.1} parent=1 // pred_region
      %50 = dma.done [#allocation7], 64
    $region21: #{tpu_custom_call.1} parent=1 // pred_fallthru
      _
    // Predicated region
    $region22: #{tpu_custom_call.1} parent=1 // pred_check
      _
    $region23: #{tpu_custom_call.1} parent=1 // pred_check_branch
      %52 = sbr.rel (0) target = $region25
    $region24: #{tpu_custom_call.1} parent=1 // pred_region
      %53 = dma.done [#allocation7], 256
    $region25: #{tpu_custom_call.1} parent=1 // pred_fallthru
      _
    %55 = vst [vmem:[#allocation2] sm:$0xff] 0.0
    %56 = vst [vmem:[#allocation2 + $0x8] sm:$0xff] 0.0
    %57 = vst [vmem:[#allocation2 + $0x10] sm:$0xff] 0.0
    %58 = vst [vmem:[#allocation2 + $0x18] sm:$0xff] 0.0
    %59 = vst [vmem:[#allocation2 + $0x20] sm:$0xff] 0.0
    %60 = vst [vmem:[#allocation2 + $0x28] sm:$0xff] 0.0
    %61 = vst [vmem:[#allocation2 + $0x30] sm:$0xff] 0.0
    %62 = vst [vmem:[#allocation2 + $0x38] sm:$0xff] 0.0
    %63 = vst [vmem:[#allocation2 + $0x40] sm:$0xff] 0.0
    %64 = vst [vmem:[#allocation2 + $0x48] sm:$0xff] 0.0
    %65 = vst [vmem:[#allocation2 + $0x50] sm:$0xff] 0.0
    %66 = vst [vmem:[#allocation2 + $0x58] sm:$0xff] 0.0
    %67 = vst [vmem:[#allocation2 + $0x60] sm:$0xff] 0.0
    %68 = vst [vmem:[#allocation2 + $0x68] sm:$0xff] 0.0
    %69 = vst [vmem:[#allocation2 + $0x70] sm:$0xff] 0.0
    %70 = vst [vmem:[#allocation2 + $0x78] sm:$0xff] 0.0
    %71 = vst [vmem:[#allocation2 + $0x80] sm:$0xff] 0.0
    %72 = vst [vmem:[#allocation2 + $0x88] sm:$0xff] 0.0
    %73 = vst [vmem:[#allocation2 + $0x90] sm:$0xff] 0.0
    %74 = vst [vmem:[#allocation2 + $0x98] sm:$0xff] 0.0
    %75 = vst [vmem:[#allocation2 + $0xa0] sm:$0xff] 0.0
    %76 = vst [vmem:[#allocation2 + $0xa8] sm:$0xff] 0.0
    %77 = vst [vmem:[#allocation2 + $0xb0] sm:$0xff] 0.0
    %78 = vst [vmem:[#allocation2 + $0xb8] sm:$0xff] 0.0
    %79 = vst [vmem:[#allocation2 + $0xc0] sm:$0xff] 0.0
    %80 = vst [vmem:[#allocation2 + $0xc8] sm:$0xff] 0.0
    %81 = vst [vmem:[#allocation2 + $0xd0] sm:$0xff] 0.0
    %82 = vst [vmem:[#allocation2 + $0xd8] sm:$0xff] 0.0
    %83 = vst [vmem:[#allocation2 + $0xe0] sm:$0xff] 0.0
    %84 = vst [vmem:[#allocation2 + $0xe8] sm:$0xff] 0.0
    %85 = vst [vmem:[#allocation2 + $0xf0] sm:$0xff] 0.0
    %86 = vst [vmem:[#allocation2 + $0xf8] sm:$0xff] 0.0
    %87 = vst [vmem:[#allocation2 + $0x100] sm:$0xff] 0.0
    %88 = vst [vmem:[#allocation2 + $0x108] sm:$0xff] 0.0
    %89 = vst [vmem:[#allocation2 + $0x110] sm:$0xff] 0.0
    %90 = vst [vmem:[#allocation2 + $0x118] sm:$0xff] 0.0
    %91 = vst [vmem:[#allocation2 + $0x120] sm:$0xff] 0.0
    %92 = vst [vmem:[#allocation2 + $0x128] sm:$0xff] 0.0
    %93 = vst [vmem:[#allocation2 + $0x130] sm:$0xff] 0.0
    %94 = vst [vmem:[#allocation2 + $0x138] sm:$0xff] 0.0
    %95 = vst [vmem:[#allocation2 + $0x140] sm:$0xff] 0.0
    %96 = vst [vmem:[#allocation2 + $0x148] sm:$0xff] 0.0
    %97 = vst [vmem:[#allocation2 + $0x150] sm:$0xff] 0.0
    %98 = vst [vmem:[#allocation2 + $0x158] sm:$0xff] 0.0
    %99 = vst [vmem:[#allocation2 + $0x160] sm:$0xff] 0.0
    %100 = vst [vmem:[#allocation2 + $0x168] sm:$0xff] 0.0
    %101 = vst [vmem:[#allocation2 + $0x170] sm:$0xff] 0.0
    %102 = vst [vmem:[#allocation2 + $0x178] sm:$0xff] 0.0
    %103 = vst [vmem:[#allocation2 + $0x180] sm:$0xff] 0.0
    %104 = vst [vmem:[#allocation2 + $0x188] sm:$0xff] 0.0
    %105 = vst [vmem:[#allocation2 + $0x190] sm:$0xff] 0.0
    %106 = vst [vmem:[#allocation2 + $0x198] sm:$0xff] 0.0
    %107 = vst [vmem:[#allocation2 + $0x1a0] sm:$0xff] 0.0
    %108 = vst [vmem:[#allocation2 + $0x1a8] sm:$0xff] 0.0
    %109 = vst [vmem:[#allocation2 + $0x1b0] sm:$0xff] 0.0
    %110 = vst [vmem:[#allocation2 + $0x1b8] sm:$0xff] 0.0
    %111 = vst [vmem:[#allocation2 + $0x1c0] sm:$0xff] 0.0
    %112 = vst [vmem:[#allocation2 + $0x1c8] sm:$0xff] 0.0
    %113 = vst [vmem:[#allocation2 + $0x1d0] sm:$0xff] 0.0
    %114 = vst [vmem:[#allocation2 + $0x1d8] sm:$0xff] 0.0
    %115 = vst [vmem:[#allocation2 + $0x1e0] sm:$0xff] 0.0
    %116 = vst [vmem:[#allocation2 + $0x1e8] sm:$0xff] 0.0
    %117 = vst [vmem:[#allocation2 + $0x1f0] sm:$0xff] 0.0
    %118 = vst [vmem:[#allocation2 + $0x1f8] sm:$0xff] 0.0
    %v119 = vlaneseq
    %vm120 = vcmp.ge.s32.totalorder %v119, 0
    %vm121 = vcmp.lt.s32.totalorder %v119, 512
    %vm122 = vmand %vm120, %vm121
    %s123 = scalar_lea.vmem [#allocation2], 288
    %124 = vst.msk [vmem:[%s123] ss:$8 sm:$0xf] %vm122, 1.0
    %125 = vst.msk [vmem:[%s123] ss:$8 sm:$0x0] %vm122, 1.0
    %v126 = vlaneseq
    %v127 = vand.u32 %v126, 127
    %v128 = vadd.s32 %v127, 128
    %v129 = vadd.s32 %v127, 256
    %v130 = vadd.s32 %v127, 384
    %v131 = vand.u32 %v127, 15
    %v132 = vand.u32 %v128, 15
    %v133 = vand.u32 %v129, 15
    %v134 = vand.u32 %v130, 15
    %v135 = vshra.s32 %v127, 4
    %v136 = vshra.s32 %v128, 4
    %v137 = vshra.s32 %v129, 4
    %v138 = vshra.s32 %v130, 4
    %v139 = vand.u32 %v135, 15
    %v140 = vand.u32 %v136, 15
    %v141 = vand.u32 %v137, 15
    %v142 = vand.u32 %v138, 15
    %vm143 = vcmp.eq.s32.totalorder %v131, 0
    %vm144 = vcmp.eq.s32.totalorder %v132, 0
    %vm145 = vcmp.eq.s32.totalorder %v133, 0
    %vm146 = vcmp.eq.s32.totalorder %v134, 0
    %vm147 = vcmp.eq.s32.totalorder %v131, 15
    %vm148 = vcmp.eq.s32.totalorder %v132, 15
    %vm149 = vcmp.eq.s32.totalorder %v133, 15
    %vm150 = vcmp.eq.s32.totalorder %v134, 15
    %vm151 = vcmp.eq.s32.totalorder %v139, 0
    %vm152 = vcmp.eq.s32.totalorder %v140, 0
    %vm153 = vcmp.eq.s32.totalorder %v141, 0
    %vm154 = vcmp.eq.s32.totalorder %v142, 0
    %vm155 = vcmp.eq.s32.totalorder %v139, 15
    %vm156 = vcmp.eq.s32.totalorder %v140, 15
    %vm157 = vcmp.eq.s32.totalorder %v141, 15
    %vm158 = vcmp.eq.s32.totalorder %v142, 15
    %v159 = vld [vmem:[#allocation6] sm:$0xf]
    %v160 = vld [vmem:[#allocation3] sm:$0xff]
    %v161 = vld [vmem:[#allocation3 + $0x8] sm:$0xff]
    %v162 = vld [vmem:[#allocation3 + $0x10] sm:$0xff]
    %v163 = vld [vmem:[#allocation3 + $0x18] sm:$0xff]
    %164 = vrot.lane.b32.xlu0 %v160, 16
    %v165 = vpop.permute.xlu0 %164
    %166 = vrot.lane.b32.xlu0 %v161, 16
    %v167 = vpop.permute.xlu0 %166
    %168 = vrot.lane.b32.xlu0 %v162, 16
    %v169 = vpop.permute.xlu0 %168
    %170 = vrot.lane.b32.xlu0 %v163, 16
    %v171 = vpop.permute.xlu0 %170
    %vm172 = vcmp.lt.s32.totalorder %v127, 16
    %v173 = vsel %vm172, %v169, %v171
    %v174 = vsel %vm172, %v167, %v169
    %v175 = vsel %vm172, %v165, %v167
    %v176 = vsel %vm172, %v171, %v165
    %v177 = vsel %vm151, 1, 0
    %v178 = vsel %vm152, 1, 0
    %v179 = vsel %vm153, 1, 0
    %v180 = vsel %vm154, 1, 0
    %vm181 = vcmp.eq.s32.totalorder %v177, 1
    %vm182 = vcmp.eq.s32.totalorder %v178, 1
    %vm183 = vcmp.eq.s32.totalorder %v179, 1
    %vm184 = vcmp.eq.s32.totalorder %v180, 1
    %v185 = vsel %vm181, %v160, %v176
    %v186 = vsel %vm182, %v161, %v175
    %v187 = vsel %vm183, %v162, %v174
    %v188 = vsel %vm184, %v163, %v173
    %189 = vrot.lane.b32.xlu0 %v185, 1
    %v190 = vpop.permute.xlu0 %189
    %191 = vrot.lane.b32.xlu0 %v186, 1
    %v192 = vpop.permute.xlu0 %191
    %193 = vrot.lane.b32.xlu0 %v187, 1
    %v194 = vpop.permute.xlu0 %193
    %195 = vrot.lane.b32.xlu0 %v188, 1
    %v196 = vpop.permute.xlu0 %195
    %vm197 = vcmp.lt.s32.totalorder %v127, 1
    %v198 = vsel %vm197, %v194, %v196
    %v199 = vsel %vm197, %v192, %v194
    %v200 = vsel %vm197, %v190, %v192
    %v201 = vsel %vm197, %v196, %v190
    %v202 = vsel %vm143, 1, 0
    %v203 = vsel %vm144, 1, 0
    %v204 = vsel %vm145, 1, 0
    %v205 = vsel %vm146, 1, 0
    %vm206 = vcmp.eq.s32.totalorder %v202, 1
    %vm207 = vcmp.eq.s32.totalorder %v203, 1
    %vm208 = vcmp.eq.s32.totalorder %v204, 1
    %vm209 = vcmp.eq.s32.totalorder %v205, 1
    %v210 = vsel %vm206, %v185, %v201
    %v211 = vsel %vm207, %v186, %v200
    %v212 = vsel %vm208, %v187, %v199
    %v213 = vsel %vm209, %v188, %v198
    %214 = vst [vmem:[#allocation2] sm:$0xff] %v210
    %215 = vst [vmem:[#allocation2 + $0x8] sm:$0xff] %v211
    %216 = vst [vmem:[#allocation2 + $0x10] sm:$0xff] %v212
    %217 = vst [vmem:[#allocation2 + $0x18] sm:$0xff] %v213
    %218 = vst [vmem:[#allocation2 + $0x20] sm:$0xff] %v185
    %219 = vst [vmem:[#allocation2 + $0x28] sm:$0xff] %v186
    %220 = vst [vmem:[#allocation2 + $0x30] sm:$0xff] %v187
    %221 = vst [vmem:[#allocation2 + $0x38] sm:$0xff] %v188
    %222 = vrot.lane.b32.xlu0 %v185, 127
    %v223 = vpop.permute.xlu0 %222
    %224 = vrot.lane.b32.xlu0 %v186, 127
    %v225 = vpop.permute.xlu0 %224
    %226 = vrot.lane.b32.xlu0 %v187, 127
    %v227 = vpop.permute.xlu0 %226
    %228 = vrot.lane.b32.xlu0 %v188, 127
    %v229 = vpop.permute.xlu0 %228
    %vm230 = vcmp.lt.s32.totalorder %v127, 127
    %v231 = vsel %vm230, %v227, %v229
    %v232 = vsel %vm230, %v225, %v227
    %v233 = vsel %vm230, %v223, %v225
    %v234 = vsel %vm230, %v229, %v223
    %v235 = vsel %vm147, 1, 0
    %v236 = vsel %vm148, 1, 0
    %v237 = vsel %vm149, 1, 0
    %v238 = vsel %vm150, 1, 0
    %vm239 = vcmp.eq.s32.totalorder %v235, 1
    %vm240 = vcmp.eq.s32.totalorder %v236, 1
    %vm241 = vcmp.eq.s32.totalorder %v237, 1
    %vm242 = vcmp.eq.s32.totalorder %v238, 1
    %v243 = vsel %vm239, %v185, %v233
    %v244 = vsel %vm240, %v186, %v232
    %v245 = vsel %vm241, %v187, %v231
    %v246 = vsel %vm242, %v188, %v234
    %247 = vst [vmem:[#allocation2 + $0x40] sm:$0xff] %v243
    %248 = vst [vmem:[#allocation2 + $0x48] sm:$0xff] %v244
    %249 = vst [vmem:[#allocation2 + $0x50] sm:$0xff] %v245
    %250 = vst [vmem:[#allocation2 + $0x58] sm:$0xff] %v246
    %251 = vrot.lane.b32.xlu0 %v160, 1
    %v252 = vpop.permute.xlu0 %251
    %253 = vrot.lane.b32.xlu0 %v161, 1
    %v254 = vpop.permute.xlu0 %253
    %255 = vrot.lane.b32.xlu0 %v162, 1
    %v256 = vpop.permute.xlu0 %255
    %257 = vrot.lane.b32.xlu0 %v163, 1
    %v258 = vpop.permute.xlu0 %257
    %v259 = vsel %vm197, %v256, %v258
    %v260 = vsel %vm197, %v254, %v256
    %v261 = vsel %vm197, %v252, %v254
    %v262 = vsel %vm197, %v258, %v252
    %v263 = vsel %vm206, %v160, %v262
    %v264 = vsel %vm207, %v161, %v261
    %v265 = vsel %vm208, %v162, %v260
    %v266 = vsel %vm209, %v163, %v259
    %267 = vst [vmem:[#allocation2 + $0x60] sm:$0xff] %v263
    %268 = vst [vmem:[#allocation2 + $0x68] sm:$0xff] %v264
    %269 = vst [vmem:[#allocation2 + $0x70] sm:$0xff] %v265
    %270 = vst [vmem:[#allocation2 + $0x78] sm:$0xff] %v266
    %271 = vst [vmem:[#allocation2 + $0x80] sm:$0xff] %v160
    %272 = vst [vmem:[#allocation2 + $0x88] sm:$0xff] %v161
    %273 = vst [vmem:[#allocation2 + $0x90] sm:$0xff] %v162
    %274 = vst [vmem:[#allocation2 + $0x98] sm:$0xff] %v163
    %275 = vrot.lane.b32.xlu0 %v160, 127
    %v276 = vpop.permute.xlu0 %275
    %277 = vrot.lane.b32.xlu0 %v161, 127
    %v278 = vpop.permute.xlu0 %277
    %279 = vrot.lane.b32.xlu0 %v162, 127
    %v280 = vpop.permute.xlu0 %279
    %281 = vrot.lane.b32.xlu0 %v163, 127
    %v282 = vpop.permute.xlu0 %281
    %v283 = vsel %vm230, %v280, %v282
    %v284 = vsel %vm230, %v278, %v280
    %v285 = vsel %vm230, %v276, %v278
    %v286 = vsel %vm230, %v282, %v276
    %v287 = vsel %vm239, %v160, %v285
    %v288 = vsel %vm240, %v161, %v284
    %v289 = vsel %vm241, %v162, %v283
    %v290 = vsel %vm242, %v163, %v286
    %291 = vst [vmem:[#allocation2 + $0xa0] sm:$0xff] %v287
    %292 = vst [vmem:[#allocation2 + $0xa8] sm:$0xff] %v288
    %293 = vst [vmem:[#allocation2 + $0xb0] sm:$0xff] %v289
    %294 = vst [vmem:[#allocation2 + $0xb8] sm:$0xff] %v290
    %295 = vrot.lane.b32.xlu0 %v160, 112
    %v296 = vpop.permute.xlu0 %295
    %297 = vrot.lane.b32.xlu0 %v161, 112
    %v298 = vpop.permute.xlu0 %297
    %299 = vrot.lane.b32.xlu0 %v162, 112
    %v300 = vpop.permute.xlu0 %299
    %301 = vrot.lane.b32.xlu0 %v163, 112
    %v302 = vpop.permute.xlu0 %301
    %vm303 = vcmp.lt.s32.totalorder %v127, 112
    %v304 = vsel %vm303, %v300, %v302
    %v305 = vsel %vm303, %v298, %v300
    %v306 = vsel %vm303, %v296, %v298
    %v307 = vsel %vm303, %v302, %v296
    %v308 = vsel %vm155, 1, 0
    %v309 = vsel %vm156, 1, 0
    %v310 = vsel %vm157, 1, 0
    %v311 = vsel %vm158, 1, 0
    %vm312 = vcmp.eq.s32.totalorder %v308, 1
    %vm313 = vcmp.eq.s32.totalorder %v309, 1
    %vm314 = vcmp.eq.s32.totalorder %v310, 1
    %vm315 = vcmp.eq.s32.totalorder %v311, 1
    %v316 = vsel %vm312, %v160, %v306
    %v317 = vsel %vm313, %v161, %v305
    %v318 = vsel %vm314, %v162, %v304
    %v319 = vsel %vm315, %v163, %v307
    %320 = vrot.lane.b32.xlu0 %v316, 1
    %v321 = vpop.permute.xlu0 %320
    %322 = vrot.lane.b32.xlu0 %v317, 1
    %v323 = vpop.permute.xlu0 %322
    %324 = vrot.lane.b32.xlu0 %v318, 1
    %v325 = vpop.permute.xlu0 %324
    %326 = vrot.lane.b32.xlu0 %v319, 1
    %v327 = vpop.permute.xlu0 %326
    %v328 = vsel %vm197, %v325, %v327
    %v329 = vsel %vm197, %v323, %v325
    %v330 = vsel %vm197, %v321, %v323
    %v331 = vsel %vm197, %v327, %v321
    %v332 = vsel %vm206, %v316, %v331
    %v333 = vsel %vm207, %v317, %v330
    %v334 = vsel %vm208, %v318, %v329
    %v335 = vsel %vm209, %v319, %v328
    %336 = vst [vmem:[#allocation2 + $0xc0] sm:$0xff] %v332
    %337 = vst [vmem:[#allocation2 + $0xc8] sm:$0xff] %v333
    %338 = vst [vmem:[#allocation2 + $0xd0] sm:$0xff] %v334
    %339 = vst [vmem:[#allocation2 + $0xd8] sm:$0xff] %v335
    %340 = vst [vmem:[#allocation2 + $0xe0] sm:$0xff] %v316
    %341 = vst [vmem:[#allocation2 + $0xe8] sm:$0xff] %v317
    %342 = vst [vmem:[#allocation2 + $0xf0] sm:$0xff] %v318
    %343 = vst [vmem:[#allocation2 + $0xf8] sm:$0xff] %v319
    %344 = vrot.lane.b32.xlu0 %v316, 127
    %v345 = vpop.permute.xlu0 %344
    %346 = vrot.lane.b32.xlu0 %v317, 127
    %v347 = vpop.permute.xlu0 %346
    %348 = vrot.lane.b32.xlu0 %v318, 127
    %v349 = vpop.permute.xlu0 %348
    %350 = vrot.lane.b32.xlu0 %v319, 127
    %v351 = vpop.permute.xlu0 %350
    %v352 = vsel %vm230, %v349, %v351
    %v353 = vsel %vm230, %v347, %v349
    %v354 = vsel %vm230, %v345, %v347
    %v355 = vsel %vm230, %v351, %v345
    %v356 = vsel %vm239, %v316, %v354
    %v357 = vsel %vm240, %v317, %v353
    %v358 = vsel %vm241, %v318, %v352
    %v359 = vsel %vm242, %v319, %v355
    %360 = vst [vmem:[#allocation2 + $0x100] sm:$0xff] %v356
    %361 = vst [vmem:[#allocation2 + $0x108] sm:$0xff] %v357
    %362 = vst [vmem:[#allocation2 + $0x110] sm:$0xff] %v358
    %363 = vst [vmem:[#allocation2 + $0x118] sm:$0xff] %v359
    %v364 = vld [vmem:[#allocation8] sm:$0xf]
    %v365 = vld [vmem:[#allocation2] sm:$0xff]
    %v366 = vld [vmem:[#allocation2 + $0x8] sm:$0xff]
    %v367 = vld [vmem:[#allocation2 + $0x10] sm:$0xff]
    %v368 = vld [vmem:[#allocation2 + $0x18] sm:$0xff]
    %v369 = vld [vmem:[#allocation2 + $0x20] sm:$0xff]
    %v370 = vld [vmem:[#allocation2 + $0x28] sm:$0xff]
    %v371 = vld [vmem:[#allocation2 + $0x30] sm:$0xff]
    %v372 = vld [vmem:[#allocation2 + $0x38] sm:$0xff]
    %v373 = vld [vmem:[#allocation2 + $0x40] sm:$0xff]
    %v374 = vld [vmem:[#allocation2 + $0x48] sm:$0xff]
    %v375 = vld [vmem:[#allocation2 + $0x50] sm:$0xff]
    %v376 = vld [vmem:[#allocation2 + $0x58] sm:$0xff]
    %v377 = vld [vmem:[#allocation2 + $0x60] sm:$0xff]
    %v378 = vld [vmem:[#allocation2 + $0x68] sm:$0xff]
    %v379 = vld [vmem:[#allocation2 + $0x70] sm:$0xff]
    %v380 = vld [vmem:[#allocation2 + $0x78] sm:$0xff]
    %v381 = vld [vmem:[#allocation2 + $0x80] sm:$0xff]
    %v382 = vld [vmem:[#allocation2 + $0x88] sm:$0xff]
    %v383 = vld [vmem:[#allocation2 + $0x90] sm:$0xff]
    %v384 = vld [vmem:[#allocation2 + $0x98] sm:$0xff]
    %v385 = vld [vmem:[#allocation2 + $0xa0] sm:$0xff]
    %v386 = vld [vmem:[#allocation2 + $0xa8] sm:$0xff]
    %v387 = vld [vmem:[#allocation2 + $0xb0] sm:$0xff]
    %v388 = vld [vmem:[#allocation2 + $0xb8] sm:$0xff]
    %v389 = vld [vmem:[#allocation2 + $0xc0] sm:$0xff]
    %v390 = vld [vmem:[#allocation2 + $0xc8] sm:$0xff]
    %v391 = vld [vmem:[#allocation2 + $0xd0] sm:$0xff]
    %v392 = vld [vmem:[#allocation2 + $0xd8] sm:$0xff]
    %v393 = vld [vmem:[#allocation2 + $0xe0] sm:$0xff]
    %v394 = vld [vmem:[#allocation2 + $0xe8] sm:$0xff]
    %v395 = vld [vmem:[#allocation2 + $0xf0] sm:$0xff]
    %v396 = vld [vmem:[#allocation2 + $0xf8] sm:$0xff]
    %v397 = vld [vmem:[#allocation2 + $0x100] sm:$0xff]
    %v398 = vld [vmem:[#allocation2 + $0x108] sm:$0xff]
    %v399 = vld [vmem:[#allocation2 + $0x110] sm:$0xff]
    %v400 = vld [vmem:[#allocation2 + $0x118] sm:$0xff]
    %v401 = vld [vmem:[#allocation2 + $0x120] sm:$0xff]
    %v402 = vld [vmem:[#allocation2 + $0x128] sm:$0xff]
    %v403 = vld [vmem:[#allocation2 + $0x130] sm:$0xff]
    %v404 = vld [vmem:[#allocation2 + $0x138] sm:$0xff]
    %v405 = vld [vmem:[#allocation2 + $0x140] sm:$0xff]
    %v406 = vld [vmem:[#allocation2 + $0x148] sm:$0xff]
    %v407 = vld [vmem:[#allocation2 + $0x150] sm:$0xff]
    %v408 = vld [vmem:[#allocation2 + $0x158] sm:$0xff]
    %v409 = vld [vmem:[#allocation2 + $0x160] sm:$0xff]
    %v410 = vld [vmem:[#allocation2 + $0x168] sm:$0xff]
    %v411 = vld [vmem:[#allocation2 + $0x170] sm:$0xff]
    %v412 = vld [vmem:[#allocation2 + $0x178] sm:$0xff]
    %v413 = vld [vmem:[#allocation2 + $0x180] sm:$0xff]
    %v414 = vld [vmem:[#allocation2 + $0x188] sm:$0xff]
    %v415 = vld [vmem:[#allocation2 + $0x190] sm:$0xff]
    %v416 = vld [vmem:[#allocation2 + $0x198] sm:$0xff]
    %v417 = vld [vmem:[#allocation2 + $0x1a0] sm:$0xff]
    %v418 = vld [vmem:[#allocation2 + $0x1a8] sm:$0xff]
    %v419 = vld [vmem:[#allocation2 + $0x1b0] sm:$0xff]
    %v420 = vld [vmem:[#allocation2 + $0x1b8] sm:$0xff]
    %v421 = vld [vmem:[#allocation2 + $0x1c0] sm:$0xff]
    %v422 = vld [vmem:[#allocation2 + $0x1c8] sm:$0xff]
    %v423 = vld [vmem:[#allocation2 + $0x1d0] sm:$0xff]
    %v424 = vld [vmem:[#allocation2 + $0x1d8] sm:$0xff]
    %v425 = vld [vmem:[#allocation2 + $0x1e0] sm:$0xff]
    %v426 = vld [vmem:[#allocation2 + $0x1e8] sm:$0xff]
    %v427 = vld [vmem:[#allocation2 + $0x1f0] sm:$0xff]
    %v428 = vld [vmem:[#allocation2 + $0x1f8] sm:$0xff]
    %v429 = vpack.c.bf16 %v369, %v365
    %v430 = vpack.c.bf16 %v370, %v366
    %v431 = vpack.c.bf16 %v371, %v367
    %v432 = vpack.c.bf16 %v372, %v368
    %v433 = vpack.c.bf16 %v377, %v373
    %v434 = vpack.c.bf16 %v378, %v374
    %v435 = vpack.c.bf16 %v379, %v375
    %v436 = vpack.c.bf16 %v380, %v376
    %v437 = vpack.c.bf16 %v385, %v381
    %v438 = vpack.c.bf16 %v386, %v382
    %v439 = vpack.c.bf16 %v387, %v383
    %v440 = vpack.c.bf16 %v388, %v384
    %v441 = vpack.c.bf16 %v393, %v389
    %v442 = vpack.c.bf16 %v394, %v390
    %v443 = vpack.c.bf16 %v395, %v391
    %v444 = vpack.c.bf16 %v396, %v392
    %v445 = vpack.c.bf16 %v401, %v397
    %v446 = vpack.c.bf16 %v402, %v398
    %v447 = vpack.c.bf16 %v403, %v399
    %v448 = vpack.c.bf16 %v404, %v400
    %v449 = vpack.c.bf16 %v409, %v405
    %v450 = vpack.c.bf16 %v410, %v406
    %v451 = vpack.c.bf16 %v411, %v407
    %v452 = vpack.c.bf16 %v412, %v408
    %v453 = vpack.c.bf16 %v417, %v413
    %v454 = vpack.c.bf16 %v418, %v414
    %v455 = vpack.c.bf16 %v419, %v415
    %v456 = vpack.c.bf16 %v420, %v416
    %v457 = vpack.c.bf16 %v425, %v421
    %v458 = vpack.c.bf16 %v426, %v422
    %v459 = vpack.c.bf16 %v427, %v423
    %v460 = vpack.c.bf16 %v428, %v424
    %461 = vmatprep.subr.bf16.mxu0 %v430
    %462 = vmatpush1.bf16.msra.mxu0 %v429
    %463 = vmatprep.subr.bf16.mxu0 %v434
    %464 = vmatpush1.bf16.msra.mxu0 %v433
    %465 = vmatprep.subr.bf16.mxu0 %v438
    %466 = vmatpush1.bf16.msra.mxu0 %v437
    %467 = vmatprep.subr.bf16.mxu0 %v442
    %468 = vmatpush1.bf16.msra.mxu0 %v441
    %469 = vmatprep.subr.bf16.mxu0 %v446
    %470 = vmatpush1.bf16.msra.mxu0 %v445
    %471 = vmatprep.subr.bf16.mxu0 %v450
    %472 = vmatpush1.bf16.msra.mxu0 %v449
    %473 = vmatprep.subr.bf16.mxu0 %v454
    %474 = vmatpush1.bf16.msra.mxu0 %v453
    %475 = vmatprep.subr.bf16.mxu0 %v458
    %476 = vmatpush1.bf16.msra.mxu0 %v457
    %477 = vmatprep.subr.bf16.mxu0 0
    %478 = vmatpush1.bf16.msra.mxu0 0
    %479 = vmatprep.subr.bf16.mxu0 0
    %480 = vmatpush1.bf16.msra.mxu0 0
    %481 = vmatprep.subr.bf16.mxu0 0
    %482 = vmatpush1.bf16.msra.mxu0 0
    %483 = vmatprep.subr.bf16.mxu0 0
    %484 = vmatpush1.bf16.msra.mxu0 0
    %485 = vmatprep.subr.bf16.mxu0 0
    %486 = vmatpush1.bf16.msra.mxu0 0
    %487 = vmatprep.subr.bf16.mxu0 0
    %488 = vmatpush1.bf16.msra.mxu0 0
    %489 = vmatprep.subr.bf16.mxu0 0
    %490 = vmatpush1.bf16.msra.mxu0 0
    %491 = vmatprep.subr.bf16.mxu0 0
    %492 = vmatpush1.bf16.msra.mxu0 0
    %493 = vmatprep.mubr.bf16.mxu0 0
    %494 = vmatmul.mubr.bf16.gmra.mrb[0].mxu0 %v364
    %v495 = vpop.f32.mrb[0].mxu0
    %v496 = vadd.f32 0.0, %v495
    %v497 = vpop.f32.mrb[0].mxu0
    %v498 = vadd.f32 0.0, %v497
    %v499 = vpop.f32.mrb[0].mxu0
    %v500 = vpop.f32.mrb[0].mxu0
    %501 = vdwg.mxu0
    %502 = vmatprep.subr.bf16.mxu0 %v432
    %503 = vmatpush1.bf16.msra.mxu0 %v431
    %504 = vmatprep.subr.bf16.mxu0 %v436
    %505 = vmatpush1.bf16.msra.mxu0 %v435
    %506 = vmatprep.subr.bf16.mxu0 %v440
    %507 = vmatpush1.bf16.msra.mxu0 %v439
    %508 = vmatprep.subr.bf16.mxu0 %v444
    %509 = vmatpush1.bf16.msra.mxu0 %v443
    %510 = vmatprep.subr.bf16.mxu0 %v448
    %511 = vmatpush1.bf16.msra.mxu0 %v447
    %512 = vmatprep.subr.bf16.mxu0 %v452
    %513 = vmatpush1.bf16.msra.mxu0 %v451
    %514 = vmatprep.subr.bf16.mxu0 %v456
    %515 = vmatpush1.bf16.msra.mxu0 %v455
    %516 = vmatprep.subr.bf16.mxu0 %v460
    %517 = vmatpush1.bf16.msra.mxu0 %v459
    %518 = vmatprep.subr.bf16.mxu0 0
    %519 = vmatpush1.bf16.msra.mxu0 0
    %520 = vmatprep.subr.bf16.mxu0 0
    %521 = vmatpush1.bf16.msra.mxu0 0
    %522 = vmatprep.subr.bf16.mxu0 0
    %523 = vmatpush1.bf16.msra.mxu0 0
    %524 = vmatprep.subr.bf16.mxu0 0
    %525 = vmatpush1.bf16.msra.mxu0 0
    %526 = vmatprep.subr.bf16.mxu0 0
    %527 = vmatpush1.bf16.msra.mxu0 0
    %528 = vmatprep.subr.bf16.mxu0 0
    %529 = vmatpush1.bf16.msra.mxu0 0
    %530 = vmatprep.subr.bf16.mxu0 0
    %531 = vmatpush1.bf16.msra.mxu0 0
    %532 = vmatprep.subr.bf16.mxu0 0
    %533 = vmatpush1.bf16.msra.mxu0 0
    %534 = vmatprep.mubr.bf16.mxu0 0
    %535 = vmatmul.mubr.bf16.gmra.mrb[0].mxu0 %v364
    %v536 = vpop.f32.mrb[0].mxu0
    %v537 = vadd.f32 0.0, %v536
    %v538 = vpop.f32.mrb[0].mxu0
    %v539 = vadd.f32 0.0, %v538
    %v540 = vpop.f32.mrb[0].mxu0
    %v541 = vpop.f32.mrb[0].mxu0
    %542 = vdwg.mxu0
    %v543 = vmax.f32 %v496, 0.0
    %v544 = vmax.f32 %v498, 0.0
    %v545 = vmax.f32 %v537, 0.0
    %v546 = vmax.f32 %v539, 0.0
    %v548 = vlaneseq
    %v549 = vshrl.u32 %v548, 7
    %v550 = vsub.s32 0, %v549
    %v551 = vrot.slane %v159, %v550
    %v552 = vlaneseq
    %v553 = vshrl.u32 %v552, 7
    %v554 = vsub.s32 1, %v553
    %v555 = vrot.slane %v159, %v554
    %v556 = vlaneseq
    %v557 = vshrl.u32 %v556, 7
    %v558 = vsub.s32 2, %v557
    %v559 = vrot.slane %v159, %v558
    %v560 = vlaneseq
    %v561 = vshrl.u32 %v560, 7
    %v562 = vsub.s32 3, %v561
    %v563 = vrot.slane %v159, %v562
    %v568 = vmul.f32 %v543, %v551
    %v569 = vmul.f32 %v544, %v555
    %v570 = vmul.f32 %v545, %v559
    %v571 = vmul.f32 %v546, %v563
    %v572 = vld [vmem:[#allocation3 + $0x20] sm:$0xff]
    %v573 = vld [vmem:[#allocation3 + $0x28] sm:$0xff]
    %v574 = vld [vmem:[#allocation3 + $0x30] sm:$0xff]
    %v575 = vld [vmem:[#allocation3 + $0x38] sm:$0xff]
    %576 = vrot.lane.b32.xlu0 %v572, 16
    %v577 = vpop.permute.xlu0 %576
    %578 = vrot.lane.b32.xlu0 %v573, 16
    %v579 = vpop.permute.xlu0 %578
    %580 = vrot.lane.b32.xlu0 %v574, 16
    %v581 = vpop.permute.xlu0 %580
    %582 = vrot.lane.b32.xlu0 %v575, 16
    %v583 = vpop.permute.xlu0 %582
    %v584 = vsel %vm172, %v581, %v583
    %v585 = vsel %vm172, %v579, %v581
    %v586 = vsel %vm172, %v577, %v579
    %v587 = vsel %vm172, %v583, %v577
    %v588 = vsel %vm181, %v572, %v587
    %v589 = vsel %vm182, %v573, %v586
    %v590 = vsel %vm183, %v574, %v585
    %v591 = vsel %vm184, %v575, %v584
    %592 = vrot.lane.b32.xlu0 %v588, 1
    %v593 = vpop.permute.xlu0 %592
    %594 = vrot.lane.b32.xlu0 %v589, 1
    %v595 = vpop.permute.xlu0 %594
    %596 = vrot.lane.b32.xlu0 %v590, 1
    %v597 = vpop.permute.xlu0 %596
    %598 = vrot.lane.b32.xlu0 %v591, 1
    %v599 = vpop.permute.xlu0 %598
    %v600 = vsel %vm197, %v597, %v599
    %v601 = vsel %vm197, %v595, %v597
    %v602 = vsel %vm197, %v593, %v595
    %v603 = vsel %vm197, %v599, %v593
    %v604 = vsel %vm206, %v588, %v603
    %v605 = vsel %vm207, %v589, %v602
    %v606 = vsel %vm208, %v590, %v601
    %v607 = vsel %vm209, %v591, %v600
    %608 = vst [vmem:[#allocation2] sm:$0xff] %v604
    %609 = vst [vmem:[#allocation2 + $0x8] sm:$0xff] %v605
    %610 = vst [vmem:[#allocation2 + $0x10] sm:$0xff] %v606
    %611 = vst [vmem:[#allocation2 + $0x18] sm:$0xff] %v607
    %612 = vst [vmem:[#allocation2 + $0x20] sm:$0xff] %v588
    %613 = vst [vmem:[#allocation2 + $0x28] sm:$0xff] %v589
    %614 = vst [vmem:[#allocation2 + $0x30] sm:$0xff] %v590
    %615 = vst [vmem:[#allocation2 + $0x38] sm:$0xff] %v591
    %616 = vrot.lane.b32.xlu0 %v588, 127
    %v617 = vpop.permute.xlu0 %616
    %618 = vrot.lane.b32.xlu0 %v589, 127
    %v619 = vpop.permute.xlu0 %618
    %620 = vrot.lane.b32.xlu0 %v590, 127
    %v621 = vpop.permute.xlu0 %620
    %622 = vrot.lane.b32.xlu0 %v591, 127
    %v623 = vpop.permute.xlu0 %622
    %v624 = vsel %vm230, %v621, %v623
    %v625 = vsel %vm230, %v619, %v621
    %v626 = vsel %vm230, %v617, %v619
    %v627 = vsel %vm230, %v623, %v617
    %v628 = vsel %vm239, %v588, %v626
    %v629 = vsel %vm240, %v589, %v625
    %v630 = vsel %vm241, %v590, %v624
    %v631 = vsel %vm242, %v591, %v627
    %632 = vst [vmem:[#allocation2 + $0x40] sm:$0xff] %v628
    %633 = vst [vmem:[#allocation2 + $0x48] sm:$0xff] %v629
    %634 = vst [vmem:[#allocation2 + $0x50] sm:$0xff] %v630
    %635 = vst [vmem:[#allocation2 + $0x58] sm:$0xff] %v631
    %636 = vrot.lane.b32.xlu0 %v572, 1
    %v637 = vpop.permute.xlu0 %636
    %638 = vrot.lane.b32.xlu0 %v573, 1
    %v639 = vpop.permute.xlu0 %638
    %640 = vrot.lane.b32.xlu0 %v574, 1
    %v641 = vpop.permute.xlu0 %640
    %642 = vrot.lane.b32.xlu0 %v575, 1
    %v643 = vpop.permute.xlu0 %642
    %v644 = vsel %vm197, %v641, %v643
    %v645 = vsel %vm197, %v639, %v641
    %v646 = vsel %vm197, %v637, %v639
    %v647 = vsel %vm197, %v643, %v637
    %v648 = vsel %vm206, %v572, %v647
    %v649 = vsel %vm207, %v573, %v646
    %v650 = vsel %vm208, %v574, %v645
    %v651 = vsel %vm209, %v575, %v644
    %652 = vst [vmem:[#allocation2 + $0x60] sm:$0xff] %v648
    %653 = vst [vmem:[#allocation2 + $0x68] sm:$0xff] %v649
    %654 = vst [vmem:[#allocation2 + $0x70] sm:$0xff] %v650
    %655 = vst [vmem:[#allocation2 + $0x78] sm:$0xff] %v651
    %656 = vst [vmem:[#allocation2 + $0x80] sm:$0xff] %v572
    %657 = vst [vmem:[#allocation2 + $0x88] sm:$0xff] %v573
    %658 = vst [vmem:[#allocation2 + $0x90] sm:$0xff] %v574
    %659 = vst [vmem:[#allocation2 + $0x98] sm:$0xff] %v575
    %660 = vrot.lane.b32.xlu0 %v572, 127
    %v661 = vpop.permute.xlu0 %660
    %662 = vrot.lane.b32.xlu0 %v573, 127
    %v663 = vpop.permute.xlu0 %662
    %664 = vrot.lane.b32.xlu0 %v574, 127
    %v665 = vpop.permute.xlu0 %664
    %666 = vrot.lane.b32.xlu0 %v575, 127
    %v667 = vpop.permute.xlu0 %666
    %v668 = vsel %vm230, %v665, %v667
    %v669 = vsel %vm230, %v663, %v665
    %v670 = vsel %vm230, %v661, %v663
    %v671 = vsel %vm230, %v667, %v661
    %v672 = vsel %vm239, %v572, %v670
    %v673 = vsel %vm240, %v573, %v669
    %v674 = vsel %vm241, %v574, %v668
    %v675 = vsel %vm242, %v575, %v671
    %676 = vst [vmem:[#allocation2 + $0xa0] sm:$0xff] %v672
    %677 = vst [vmem:[#allocation2 + $0xa8] sm:$0xff] %v673
    %678 = vst [vmem:[#allocation2 + $0xb0] sm:$0xff] %v674
    %679 = vst [vmem:[#allocation2 + $0xb8] sm:$0xff] %v675
    %680 = vrot.lane.b32.xlu0 %v572, 112
    %v681 = vpop.permute.xlu0 %680
    %682 = vrot.lane.b32.xlu0 %v573, 112
    %v683 = vpop.permute.xlu0 %682
    %684 = vrot.lane.b32.xlu0 %v574, 112
    %v685 = vpop.permute.xlu0 %684
    %686 = vrot.lane.b32.xlu0 %v575, 112
    %v687 = vpop.permute.xlu0 %686
    %v688 = vsel %vm303, %v685, %v687
    %v689 = vsel %vm303, %v683, %v685
    %v690 = vsel %vm303, %v681, %v683
    %v691 = vsel %vm303, %v687, %v681
    %v692 = vsel %vm312, %v572, %v690
    %v693 = vsel %vm313, %v573, %v689
    %v694 = vsel %vm314, %v574, %v688
    %v695 = vsel %vm315, %v575, %v691
    %696 = vrot.lane.b32.xlu0 %v692, 1
    %v697 = vpop.permute.xlu0 %696
    %698 = vrot.lane.b32.xlu0 %v693, 1
    %v699 = vpop.permute.xlu0 %698
    %700 = vrot.lane.b32.xlu0 %v694, 1
    %v701 = vpop.permute.xlu0 %700
    %702 = vrot.lane.b32.xlu0 %v695, 1
    %v703 = vpop.permute.xlu0 %702
    %v704 = vsel %vm197, %v701, %v703
    %v705 = vsel %vm197, %v699, %v701
    %v706 = vsel %vm197, %v697, %v699
    %v707 = vsel %vm197, %v703, %v697
    %v708 = vsel %vm206, %v692, %v707
    %v709 = vsel %vm207, %v693, %v706
    %v710 = vsel %vm208, %v694, %v705
    %v711 = vsel %vm209, %v695, %v704
    %712 = vst [vmem:[#allocation2 + $0xc0] sm:$0xff] %v708
    %713 = vst [vmem:[#allocation2 + $0xc8] sm:$0xff] %v709
    %714 = vst [vmem:[#allocation2 + $0xd0] sm:$0xff] %v710
    %715 = vst [vmem:[#allocation2 + $0xd8] sm:$0xff] %v711
    %716 = vst [vmem:[#allocation2 + $0xe0] sm:$0xff] %v692
    %717 = vst [vmem:[#allocation2 + $0xe8] sm:$0xff] %v693
    %718 = vst [vmem:[#allocation2 + $0xf0] sm:$0xff] %v694
    %719 = vst [vmem:[#allocation2 + $0xf8] sm:$0xff] %v695
    %720 = vrot.lane.b32.xlu0 %v692, 127
    %v721 = vpop.permute.xlu0 %720
    %722 = vrot.lane.b32.xlu0 %v693, 127
    %v723 = vpop.permute.xlu0 %722
    %724 = vrot.lane.b32.xlu0 %v694, 127
    %v725 = vpop.permute.xlu0 %724
    %726 = vrot.lane.b32.xlu0 %v695, 127
    %v727 = vpop.permute.xlu0 %726
    %v728 = vsel %vm230, %v725, %v727
    %v729 = vsel %vm230, %v723, %v725
    %v730 = vsel %vm230, %v721, %v723
    %v731 = vsel %vm230, %v727, %v721
    %v732 = vsel %vm239, %v692, %v730
    %v733 = vsel %vm240, %v693, %v729
    %v734 = vsel %vm241, %v694, %v728
    %v735 = vsel %vm242, %v695, %v731
    %736 = vst [vmem:[#allocation2 + $0x100] sm:$0xff] %v732
    %737 = vst [vmem:[#allocation2 + $0x108] sm:$0xff] %v733
    %738 = vst [vmem:[#allocation2 + $0x110] sm:$0xff] %v734
    %739 = vst [vmem:[#allocation2 + $0x118] sm:$0xff] %v735
    %v740 = vld [vmem:[#allocation8 + $0x4] sm:$0xf]
    %v741 = vld [vmem:[#allocation2] sm:$0xff]
    %v742 = vld [vmem:[#allocation2 + $0x8] sm:$0xff]
    %v743 = vld [vmem:[#allocation2 + $0x10] sm:$0xff]
    %v744 = vld [vmem:[#allocation2 + $0x18] sm:$0xff]
    %v745 = vld [vmem:[#allocation2 + $0x20] sm:$0xff]
    %v746 = vld [vmem:[#allocation2 + $0x28] sm:$0xff]
    %v747 = vld [vmem:[#allocation2 + $0x30] sm:$0xff]
    %v748 = vld [vmem:[#allocation2 + $0x38] sm:$0xff]
    %v749 = vld [vmem:[#allocation2 + $0x40] sm:$0xff]
    %v750 = vld [vmem:[#allocation2 + $0x48] sm:$0xff]
    %v751 = vld [vmem:[#allocation2 + $0x50] sm:$0xff]
    %v752 = vld [vmem:[#allocation2 + $0x58] sm:$0xff]
    %v753 = vld [vmem:[#allocation2 + $0x60] sm:$0xff]
    %v754 = vld [vmem:[#allocation2 + $0x68] sm:$0xff]
    %v755 = vld [vmem:[#allocation2 + $0x70] sm:$0xff]
    %v756 = vld [vmem:[#allocation2 + $0x78] sm:$0xff]
    %v757 = vld [vmem:[#allocation2 + $0x80] sm:$0xff]
    %v758 = vld [vmem:[#allocation2 + $0x88] sm:$0xff]
    %v759 = vld [vmem:[#allocation2 + $0x90] sm:$0xff]
    %v760 = vld [vmem:[#allocation2 + $0x98] sm:$0xff]
    %v761 = vld [vmem:[#allocation2 + $0xa0] sm:$0xff]
    %v762 = vld [vmem:[#allocation2 + $0xa8] sm:$0xff]
    %v763 = vld [vmem:[#allocation2 + $0xb0] sm:$0xff]
    %v764 = vld [vmem:[#allocation2 + $0xb8] sm:$0xff]
    %v765 = vld [vmem:[#allocation2 + $0xc0] sm:$0xff]
    %v766 = vld [vmem:[#allocation2 + $0xc8] sm:$0xff]
    %v767 = vld [vmem:[#allocation2 + $0xd0] sm:$0xff]
    %v768 = vld [vmem:[#allocation2 + $0xd8] sm:$0xff]
    %v769 = vld [vmem:[#allocation2 + $0xe0] sm:$0xff]
    %v770 = vld [vmem:[#allocation2 + $0xe8] sm:$0xff]
    %v771 = vld [vmem:[#allocation2 + $0xf0] sm:$0xff]
    %v772 = vld [vmem:[#allocation2 + $0xf8] sm:$0xff]
    %v773 = vld [vmem:[#allocation2 + $0x100] sm:$0xff]
    %v774 = vld [vmem:[#allocation2 + $0x108] sm:$0xff]
    %v775 = vld [vmem:[#allocation2 + $0x110] sm:$0xff]
    %v776 = vld [vmem:[#allocation2 + $0x118] sm:$0xff]
    %v777 = vld [vmem:[#allocation2 + $0x120] sm:$0xff]
    %v778 = vld [vmem:[#allocation2 + $0x128] sm:$0xff]
    %v779 = vld [vmem:[#allocation2 + $0x130] sm:$0xff]
    %v780 = vld [vmem:[#allocation2 + $0x138] sm:$0xff]
    %v781 = vld [vmem:[#allocation2 + $0x140] sm:$0xff]
    %v782 = vld [vmem:[#allocation2 + $0x148] sm:$0xff]
    %v783 = vld [vmem:[#allocation2 + $0x150] sm:$0xff]
    %v784 = vld [vmem:[#allocation2 + $0x158] sm:$0xff]
    %v785 = vld [vmem:[#allocation2 + $0x160] sm:$0xff]
    %v786 = vld [vmem:[#allocation2 + $0x168] sm:$0xff]
    %v787 = vld [vmem:[#allocation2 + $0x170] sm:$0xff]
    %v788 = vld [vmem:[#allocation2 + $0x178] sm:$0xff]
    %v789 = vld [vmem:[#allocation2 + $0x180] sm:$0xff]
    %v790 = vld [vmem:[#allocation2 + $0x188] sm:$0xff]
    %v791 = vld [vmem:[#allocation2 + $0x190] sm:$0xff]
    %v792 = vld [vmem:[#allocation2 + $0x198] sm:$0xff]
    %v793 = vld [vmem:[#allocation2 + $0x1a0] sm:$0xff]
    %v794 = vld [vmem:[#allocation2 + $0x1a8] sm:$0xff]
    %v795 = vld [vmem:[#allocation2 + $0x1b0] sm:$0xff]
    %v796 = vld [vmem:[#allocation2 + $0x1b8] sm:$0xff]
    %v797 = vld [vmem:[#allocation2 + $0x1c0] sm:$0xff]
    %v798 = vld [vmem:[#allocation2 + $0x1c8] sm:$0xff]
    %v799 = vld [vmem:[#allocation2 + $0x1d0] sm:$0xff]
    %v800 = vld [vmem:[#allocation2 + $0x1d8] sm:$0xff]
    %v801 = vld [vmem:[#allocation2 + $0x1e0] sm:$0xff]
    %v802 = vld [vmem:[#allocation2 + $0x1e8] sm:$0xff]
    %v803 = vld [vmem:[#allocation2 + $0x1f0] sm:$0xff]
    %v804 = vld [vmem:[#allocation2 + $0x1f8] sm:$0xff]
    %v805 = vpack.c.bf16 %v745, %v741
    %v806 = vpack.c.bf16 %v746, %v742
    %v807 = vpack.c.bf16 %v747, %v743
    %v808 = vpack.c.bf16 %v748, %v744
    %v809 = vpack.c.bf16 %v753, %v749
    %v810 = vpack.c.bf16 %v754, %v750
    %v811 = vpack.c.bf16 %v755, %v751
    %v812 = vpack.c.bf16 %v756, %v752
    %v813 = vpack.c.bf16 %v761, %v757
    %v814 = vpack.c.bf16 %v762, %v758
    %v815 = vpack.c.bf16 %v763, %v759
    %v816 = vpack.c.bf16 %v764, %v760
    %v817 = vpack.c.bf16 %v769, %v765
    %v818 = vpack.c.bf16 %v770, %v766
    %v819 = vpack.c.bf16 %v771, %v767
    %v820 = vpack.c.bf16 %v772, %v768
    %v821 = vpack.c.bf16 %v777, %v773
    %v822 = vpack.c.bf16 %v778, %v774
    %v823 = vpack.c.bf16 %v779, %v775
    %v824 = vpack.c.bf16 %v780, %v776
    %v825 = vpack.c.bf16 %v785, %v781
    %v826 = vpack.c.bf16 %v786, %v782
    %v827 = vpack.c.bf16 %v787, %v783
    %v828 = vpack.c.bf16 %v788, %v784
    %v829 = vpack.c.bf16 %v793, %v789
    %v830 = vpack.c.bf16 %v794, %v790
    %v831 = vpack.c.bf16 %v795, %v791
    %v832 = vpack.c.bf16 %v796, %v792
    %v833 = vpack.c.bf16 %v801, %v797
    %v834 = vpack.c.bf16 %v802, %v798
    %v835 = vpack.c.bf16 %v803, %v799
    %v836 = vpack.c.bf16 %v804, %v800
    %837 = vmatprep.subr.bf16.mxu0 %v806
    %838 = vmatpush1.bf16.msra.mxu0 %v805
    %839 = vmatprep.subr.bf16.mxu0 %v810
    %840 = vmatpush1.bf16.msra.mxu0 %v809
    %841 = vmatprep.subr.bf16.mxu0 %v814
    %842 = vmatpush1.bf16.msra.mxu0 %v813
    %843 = vmatprep.subr.bf16.mxu0 %v818
    %844 = vmatpush1.bf16.msra.mxu0 %v817
    %845 = vmatprep.subr.bf16.mxu0 %v822
    %846 = vmatpush1.bf16.msra.mxu0 %v821
    %847 = vmatprep.subr.bf16.mxu0 %v826
    %848 = vmatpush1.bf16.msra.mxu0 %v825
    %849 = vmatprep.subr.bf16.mxu0 %v830
    %850 = vmatpush1.bf16.msra.mxu0 %v829
    %851 = vmatprep.subr.bf16.mxu0 %v834
    %852 = vmatpush1.bf16.msra.mxu0 %v833
    %853 = vmatprep.subr.bf16.mxu0 0
    %854 = vmatpush1.bf16.msra.mxu0 0
    %855 = vmatprep.subr.bf16.mxu0 0
    %856 = vmatpush1.bf16.msra.mxu0 0
    %857 = vmatprep.subr.bf16.mxu0 0
    %858 = vmatpush1.bf16.msra.mxu0 0
    %859 = vmatprep.subr.bf16.mxu0 0
    %860 = vmatpush1.bf16.msra.mxu0 0
    %861 = vmatprep.subr.bf16.mxu0 0
    %862 = vmatpush1.bf16.msra.mxu0 0
    %863 = vmatprep.subr.bf16.mxu0 0
    %864 = vmatpush1.bf16.msra.mxu0 0
    %865 = vmatprep.subr.bf16.mxu0 0
    %866 = vmatpush1.bf16.msra.mxu0 0
    %867 = vmatprep.subr.bf16.mxu0 0
    %868 = vmatpush1.bf16.msra.mxu0 0
    %869 = vmatprep.mubr.bf16.mxu0 0
    %870 = vmatmul.mubr.bf16.gmra.mrb[0].mxu0 %v740
    %v871 = vpop.f32.mrb[0].mxu0
    %v872 = vadd.f32 0.0, %v871
    %v873 = vpop.f32.mrb[0].mxu0
    %v874 = vadd.f32 0.0, %v873
    %v875 = vpop.f32.mrb[0].mxu0
    %v876 = vpop.f32.mrb[0].mxu0
    %877 = vdwg.mxu0
    %878 = vmatprep.subr.bf16.mxu0 %v808
    %879 = vmatpush1.bf16.msra.mxu0 %v807
    %880 = vmatprep.subr.bf16.mxu0 %v812
    %881 = vmatpush1.bf16.msra.mxu0 %v811
    %882 = vmatprep.subr.bf16.mxu0 %v816
    %883 = vmatpush1.bf16.msra.mxu0 %v815
    %884 = vmatprep.subr.bf16.mxu0 %v820
    %885 = vmatpush1.bf16.msra.mxu0 %v819
    %886 = vmatprep.subr.bf16.mxu0 %v824
    %887 = vmatpush1.bf16.msra.mxu0 %v823
    %888 = vmatprep.subr.bf16.mxu0 %v828
    %889 = vmatpush1.bf16.msra.mxu0 %v827
    %890 = vmatprep.subr.bf16.mxu0 %v832
    %891 = vmatpush1.bf16.msra.mxu0 %v831
    %892 = vmatprep.subr.bf16.mxu0 %v836
    %893 = vmatpush1.bf16.msra.mxu0 %v835
    %894 = vmatprep.subr.bf16.mxu0 0
    %895 = vmatpush1.bf16.msra.mxu0 0
    %896 = vmatprep.subr.bf16.mxu0 0
    %897 = vmatpush1.bf16.msra.mxu0 0
    %898 = vmatprep.subr.bf16.mxu0 0
    %899 = vmatpush1.bf16.msra.mxu0 0
    %900 = vmatprep.subr.bf16.mxu0 0
    %901 = vmatpush1.bf16.msra.mxu0 0
    %902 = vmatprep.subr.bf16.mxu0 0
    %903 = vmatpush1.bf16.msra.mxu0 0
    %904 = vmatprep.subr.bf16.mxu0 0
    %905 = vmatpush1.bf16.msra.mxu0 0
    %906 = vmatprep.subr.bf16.mxu0 0
    %907 = vmatpush1.bf16.msra.mxu0 0
    %908 = vmatprep.subr.bf16.mxu0 0
    %909 = vmatpush1.bf16.msra.mxu0 0
    %910 = vmatprep.mubr.bf16.mxu0 0
    %911 = vmatmul.mubr.bf16.gmra.mrb[0].mxu0 %v740
    %v912 = vpop.f32.mrb[0].mxu0
    %v913 = vadd.f32 0.0, %v912
    %v914 = vpop.f32.mrb[0].mxu0
    %v915 = vadd.f32 0.0, %v914
    %v916 = vpop.f32.mrb[0].mxu0
    %v917 = vpop.f32.mrb[0].mxu0
    %918 = vdwg.mxu0
    %v919 = vmax.f32 %v872, 0.0
    %v920 = vmax.f32 %v874, 0.0
    %v921 = vmax.f32 %v913, 0.0
    %v922 = vmax.f32 %v915, 0.0
    %v923 = vmul.f32 %v919, %v551
    %v924 = vmul.f32 %v920, %v555
    %v925 = vmul.f32 %v921, %v559
    %v926 = vmul.f32 %v922, %v563
    %v927 = vadd.f32 %v568, %v923
    %v928 = vadd.f32 %v569, %v924
    %v929 = vadd.f32 %v570, %v925
    %v930 = vadd.f32 %v571, %v926
    %931 = vrot.lane.b32.xlu0 %v927, 16
    %v932 = vpop.permute.xlu0 %931
    %933 = vrot.lane.b32.xlu0 %v928, 16
    %v934 = vpop.permute.xlu0 %933
    %935 = vrot.lane.b32.xlu0 %v929, 16
    %v936 = vpop.permute.xlu0 %935
    %937 = vrot.lane.b32.xlu0 %v930, 16
    %v938 = vpop.permute.xlu0 %937
    %v939 = vsel %vm172, %v936, %v938
    %v940 = vsel %vm172, %v934, %v936
    %v941 = vsel %vm172, %v932, %v934
    %v942 = vsel %vm172, %v938, %v932
    %v943 = vsel %vm181, %v927, %v942
    %v944 = vsel %vm182, %v928, %v941
    %v945 = vsel %vm183, %v929, %v940
    %v946 = vsel %vm184, %v930, %v939
    %947 = vrot.lane.b32.xlu0 %v943, 1
    %v948 = vpop.permute.xlu0 %947
    %949 = vrot.lane.b32.xlu0 %v944, 1
    %v950 = vpop.permute.xlu0 %949
    %951 = vrot.lane.b32.xlu0 %v945, 1
    %v952 = vpop.permute.xlu0 %951
    %953 = vrot.lane.b32.xlu0 %v946, 1
    %v954 = vpop.permute.xlu0 %953
    %v955 = vsel %vm197, %v952, %v954
    %v956 = vsel %vm197, %v950, %v952
    %v957 = vsel %vm197, %v948, %v950
    %v958 = vsel %vm197, %v954, %v948
    %v959 = vsel %vm206, %v943, %v958
    %v960 = vsel %vm207, %v944, %v957
    %v961 = vsel %vm208, %v945, %v956
    %v962 = vsel %vm209, %v946, %v955
    %963 = vst [vmem:[#allocation2] sm:$0xff] %v959
    %964 = vst [vmem:[#allocation2 + $0x8] sm:$0xff] %v960
    %965 = vst [vmem:[#allocation2 + $0x10] sm:$0xff] %v961
    %966 = vst [vmem:[#allocation2 + $0x18] sm:$0xff] %v962
    %967 = vst [vmem:[#allocation2 + $0x20] sm:$0xff] %v943
    %968 = vst [vmem:[#allocation2 + $0x28] sm:$0xff] %v944
    %969 = vst [vmem:[#allocation2 + $0x30] sm:$0xff] %v945
    %970 = vst [vmem:[#allocation2 + $0x38] sm:$0xff] %v946
    %971 = vrot.lane.b32.xlu0 %v943, 127
    %v972 = vpop.permute.xlu0 %971
    %973 = vrot.lane.b32.xlu0 %v944, 127
    %v974 = vpop.permute.xlu0 %973
    %975 = vrot.lane.b32.xlu0 %v945, 127
    %v976 = vpop.permute.xlu0 %975
    %977 = vrot.lane.b32.xlu0 %v946, 127
    %v978 = vpop.permute.xlu0 %977
    %v979 = vsel %vm230, %v976, %v978
    %v980 = vsel %vm230, %v974, %v976
    %v981 = vsel %vm230, %v972, %v974
    %v982 = vsel %vm230, %v978, %v972
    %v983 = vsel %vm239, %v943, %v981
    %v984 = vsel %vm240, %v944, %v980
    %v985 = vsel %vm241, %v945, %v979
    %v986 = vsel %vm242, %v946, %v982
    %987 = vst [vmem:[#allocation2 + $0x40] sm:$0xff] %v983
    %988 = vst [vmem:[#allocation2 + $0x48] sm:$0xff] %v984
    %989 = vst [vmem:[#allocation2 + $0x50] sm:$0xff] %v985
    %990 = vst [vmem:[#allocation2 + $0x58] sm:$0xff] %v986
    %991 = vrot.lane.b32.xlu0 %v927, 1
    %v992 = vpop.permute.xlu0 %991
    %993 = vrot.lane.b32.xlu0 %v928, 1
    %v994 = vpop.permute.xlu0 %993
    %995 = vrot.lane.b32.xlu0 %v929, 1
    %v996 = vpop.permute.xlu0 %995
    %997 = vrot.lane.b32.xlu0 %v930, 1
    %v998 = vpop.permute.xlu0 %997
    %v999 = vsel %vm197, %v996, %v998
    %v1000 = vsel %vm197, %v994, %v996
    %v1001 = vsel %vm197, %v992, %v994
    %v1002 = vsel %vm197, %v998, %v992
    %v1003 = vsel %vm206, %v927, %v1002
    %v1004 = vsel %vm207, %v928, %v1001
    %v1005 = vsel %vm208, %v929, %v1000
    %v1006 = vsel %vm209, %v930, %v999
    %1007 = vst [vmem:[#allocation2 + $0x60] sm:$0xff] %v1003
    %1008 = vst [vmem:[#allocation2 + $0x68] sm:$0xff] %v1004
    %1009 = vst [vmem:[#allocation2 + $0x70] sm:$0xff] %v1005
    %1010 = vst [vmem:[#allocation2 + $0x78] sm:$0xff] %v1006
    %1011 = vst [vmem:[#allocation2 + $0x80] sm:$0xff] %v927
    %1012 = vst [vmem:[#allocation2 + $0x88] sm:$0xff] %v928
    %1013 = vst [vmem:[#allocation2 + $0x90] sm:$0xff] %v929
    %1014 = vst [vmem:[#allocation2 + $0x98] sm:$0xff] %v930
    %1015 = vrot.lane.b32.xlu0 %v927, 127
    %v1016 = vpop.permute.xlu0 %1015
    %1017 = vrot.lane.b32.xlu0 %v928, 127
    %v1018 = vpop.permute.xlu0 %1017
    %1019 = vrot.lane.b32.xlu0 %v929, 127
    %v1020 = vpop.permute.xlu0 %1019
    %1021 = vrot.lane.b32.xlu0 %v930, 127
    %v1022 = vpop.permute.xlu0 %1021
    %v1023 = vsel %vm230, %v1020, %v1022
    %v1024 = vsel %vm230, %v1018, %v1020
    %v1025 = vsel %vm230, %v1016, %v1018
    %v1026 = vsel %vm230, %v1022, %v1016
    %v1027 = vsel %vm239, %v927, %v1025
    %v1028 = vsel %vm240, %v928, %v1024
    %v1029 = vsel %vm241, %v929, %v1023
    %v1030 = vsel %vm242, %v930, %v1026
    %1031 = vst [vmem:[#allocation2 + $0xa0] sm:$0xff] %v1027
    %1032 = vst [vmem:[#allocation2 + $0xa8] sm:$0xff] %v1028
    %1033 = vst [vmem:[#allocation2 + $0xb0] sm:$0xff] %v1029
    %1034 = vst [vmem:[#allocation2 + $0xb8] sm:$0xff] %v1030
    %1035 = vrot.lane.b32.xlu0 %v927, 112
    %v1036 = vpop.permute.xlu0 %1035
    %1037 = vrot.lane.b32.xlu0 %v928, 112
    %v1038 = vpop.permute.xlu0 %1037
    %1039 = vrot.lane.b32.xlu0 %v929, 112
    %v1040 = vpop.permute.xlu0 %1039
    %1041 = vrot.lane.b32.xlu0 %v930, 112
    %v1042 = vpop.permute.xlu0 %1041
    %v1043 = vsel %vm303, %v1040, %v1042
    %v1044 = vsel %vm303, %v1038, %v1040
    %v1045 = vsel %vm303, %v1036, %v1038
    %v1046 = vsel %vm303, %v1042, %v1036
    %v1047 = vsel %vm312, %v927, %v1045
    %v1048 = vsel %vm313, %v928, %v1044
    %v1049 = vsel %vm314, %v929, %v1043
    %v1050 = vsel %vm315, %v930, %v1046
    %1051 = vrot.lane.b32.xlu0 %v1047, 1
    %v1052 = vpop.permute.xlu0 %1051
    %1053 = vrot.lane.b32.xlu0 %v1048, 1
    %v1054 = vpop.permute.xlu0 %1053
    %1055 = vrot.lane.b32.xlu0 %v1049, 1
    %v1056 = vpop.permute.xlu0 %1055
    %1057 = vrot.lane.b32.xlu0 %v1050, 1
    %v1058 = vpop.permute.xlu0 %1057
    %v1059 = vsel %vm197, %v1056, %v1058
    %v1060 = vsel %vm197, %v1054, %v1056
    %v1061 = vsel %vm197, %v1052, %v1054
    %v1062 = vsel %vm197, %v1058, %v1052
    %v1063 = vsel %vm206, %v1047, %v1062
    %v1064 = vsel %vm207, %v1048, %v1061
    %v1065 = vsel %vm208, %v1049, %v1060
    %v1066 = vsel %vm209, %v1050, %v1059
    %1067 = vst [vmem:[#allocation2 + $0xc0] sm:$0xff] %v1063
    %1068 = vst [vmem:[#allocation2 + $0xc8] sm:$0xff] %v1064
    %1069 = vst [vmem:[#allocation2 + $0xd0] sm:$0xff] %v1065
    %1070 = vst [vmem:[#allocation2 + $0xd8] sm:$0xff] %v1066
    %1071 = vst [vmem:[#allocation2 + $0xe0] sm:$0xff] %v1047
    %1072 = vst [vmem:[#allocation2 + $0xe8] sm:$0xff] %v1048
    %1073 = vst [vmem:[#allocation2 + $0xf0] sm:$0xff] %v1049
    %1074 = vst [vmem:[#allocation2 + $0xf8] sm:$0xff] %v1050
    %1075 = vrot.lane.b32.xlu0 %v1047, 127
    %v1076 = vpop.permute.xlu0 %1075
    %1077 = vrot.lane.b32.xlu0 %v1048, 127
    %v1078 = vpop.permute.xlu0 %1077
    %1079 = vrot.lane.b32.xlu0 %v1049, 127
    %v1080 = vpop.permute.xlu0 %1079
    %1081 = vrot.lane.b32.xlu0 %v1050, 127
    %v1082 = vpop.permute.xlu0 %1081
    %v1083 = vsel %vm230, %v1080, %v1082
    %v1084 = vsel %vm230, %v1078, %v1080
    %v1085 = vsel %vm230, %v1076, %v1078
    %v1086 = vsel %vm230, %v1082, %v1076
    %v1087 = vsel %vm239, %v1047, %v1085
    %v1088 = vsel %vm240, %v1048, %v1084
    %v1089 = vsel %vm241, %v1049, %v1083
    %v1090 = vsel %vm242, %v1050, %v1086
    %1091 = vst [vmem:[#allocation2 + $0x100] sm:$0xff] %v1087
    %1092 = vst [vmem:[#allocation2 + $0x108] sm:$0xff] %v1088
    %1093 = vst [vmem:[#allocation2 + $0x110] sm:$0xff] %v1089
    %1094 = vst [vmem:[#allocation2 + $0x118] sm:$0xff] %v1090
    %v1095 = vld [vmem:[#allocation8 + $0x8] sm:$0xf]
    %v1096 = vld [vmem:[#allocation2] sm:$0xff]
    %v1097 = vld [vmem:[#allocation2 + $0x8] sm:$0xff]
    %v1098 = vld [vmem:[#allocation2 + $0x10] sm:$0xff]
    %v1099 = vld [vmem:[#allocation2 + $0x18] sm:$0xff]
    %v1100 = vld [vmem:[#allocation2 + $0x20] sm:$0xff]
    %v1101 = vld [vmem:[#allocation2 + $0x28] sm:$0xff]
    %v1102 = vld [vmem:[#allocation2 + $0x30] sm:$0xff]
    %v1103 = vld [vmem:[#allocation2 + $0x38] sm:$0xff]
    %v1104 = vld [vmem:[#allocation2 + $0x40] sm:$0xff]
    %v1105 = vld [vmem:[#allocation2 + $0x48] sm:$0xff]
    %v1106 = vld [vmem:[#allocation2 + $0x50] sm:$0xff]
    %v1107 = vld [vmem:[#allocation2 + $0x58] sm:$0xff]
    %v1108 = vld [vmem:[#allocation2 + $0x60] sm:$0xff]
    %v1109 = vld [vmem:[#allocation2 + $0x68] sm:$0xff]
    %v1110 = vld [vmem:[#allocation2 + $0x70] sm:$0xff]
    %v1111 = vld [vmem:[#allocation2 + $0x78] sm:$0xff]
    %v1112 = vld [vmem:[#allocation2 + $0x80] sm:$0xff]
    %v1113 = vld [vmem:[#allocation2 + $0x88] sm:$0xff]
    %v1114 = vld [vmem:[#allocation2 + $0x90] sm:$0xff]
    %v1115 = vld [vmem:[#allocation2 + $0x98] sm:$0xff]
    %v1116 = vld [vmem:[#allocation2 + $0xa0] sm:$0xff]
    %v1117 = vld [vmem:[#allocation2 + $0xa8] sm:$0xff]
    %v1118 = vld [vmem:[#allocation2 + $0xb0] sm:$0xff]
    %v1119 = vld [vmem:[#allocation2 + $0xb8] sm:$0xff]
    %v1120 = vld [vmem:[#allocation2 + $0xc0] sm:$0xff]
    %v1121 = vld [vmem:[#allocation2 + $0xc8] sm:$0xff]
    %v1122 = vld [vmem:[#allocation2 + $0xd0] sm:$0xff]
    %v1123 = vld [vmem:[#allocation2 + $0xd8] sm:$0xff]
    %v1124 = vld [vmem:[#allocation2 + $0xe0] sm:$0xff]
    %v1125 = vld [vmem:[#allocation2 + $0xe8] sm:$0xff]
    %v1126 = vld [vmem:[#allocation2 + $0xf0] sm:$0xff]
    %v1127 = vld [vmem:[#allocation2 + $0xf8] sm:$0xff]
    %v1128 = vld [vmem:[#allocation2 + $0x100] sm:$0xff]
    %v1129 = vld [vmem:[#allocation2 + $0x108] sm:$0xff]
    %v1130 = vld [vmem:[#allocation2 + $0x110] sm:$0xff]
    %v1131 = vld [vmem:[#allocation2 + $0x118] sm:$0xff]
    %v1132 = vld [vmem:[#allocation2 + $0x120] sm:$0xff]
    %v1133 = vld [vmem:[#allocation2 + $0x128] sm:$0xff]
    %v1134 = vld [vmem:[#allocation2 + $0x130] sm:$0xff]
    %v1135 = vld [vmem:[#allocation2 + $0x138] sm:$0xff]
    %v1136 = vld [vmem:[#allocation2 + $0x140] sm:$0xff]
    %v1137 = vld [vmem:[#allocation2 + $0x148] sm:$0xff]
    %v1138 = vld [vmem:[#allocation2 + $0x150] sm:$0xff]
    %v1139 = vld [vmem:[#allocation2 + $0x158] sm:$0xff]
    %v1140 = vld [vmem:[#allocation2 + $0x160] sm:$0xff]
    %v1141 = vld [vmem:[#allocation2 + $0x168] sm:$0xff]
    %v1142 = vld [vmem:[#allocation2 + $0x170] sm:$0xff]
    %v1143 = vld [vmem:[#allocation2 + $0x178] sm:$0xff]
    %v1144 = vld [vmem:[#allocation2 + $0x180] sm:$0xff]
    %v1145 = vld [vmem:[#allocation2 + $0x188] sm:$0xff]
    %v1146 = vld [vmem:[#allocation2 + $0x190] sm:$0xff]
    %v1147 = vld [vmem:[#allocation2 + $0x198] sm:$0xff]
    %v1148 = vld [vmem:[#allocation2 + $0x1a0] sm:$0xff]
    %v1149 = vld [vmem:[#allocation2 + $0x1a8] sm:$0xff]
    %v1150 = vld [vmem:[#allocation2 + $0x1b0] sm:$0xff]
    %v1151 = vld [vmem:[#allocation2 + $0x1b8] sm:$0xff]
    %v1152 = vld [vmem:[#allocation2 + $0x1c0] sm:$0xff]
    %v1153 = vld [vmem:[#allocation2 + $0x1c8] sm:$0xff]
    %v1154 = vld [vmem:[#allocation2 + $0x1d0] sm:$0xff]
    %v1155 = vld [vmem:[#allocation2 + $0x1d8] sm:$0xff]
    %v1156 = vld [vmem:[#allocation2 + $0x1e0] sm:$0xff]
    %v1157 = vld [vmem:[#allocation2 + $0x1e8] sm:$0xff]
    %v1158 = vld [vmem:[#allocation2 + $0x1f0] sm:$0xff]
    %v1159 = vld [vmem:[#allocation2 + $0x1f8] sm:$0xff]
    %v1160 = vpack.c.bf16 %v1100, %v1096
    %v1161 = vpack.c.bf16 %v1101, %v1097
    %v1162 = vpack.c.bf16 %v1102, %v1098
    %v1163 = vpack.c.bf16 %v1103, %v1099
    %v1164 = vpack.c.bf16 %v1108, %v1104
    %v1165 = vpack.c.bf16 %v1109, %v1105
    %v1166 = vpack.c.bf16 %v1110, %v1106
    %v1167 = vpack.c.bf16 %v1111, %v1107
    %v1168 = vpack.c.bf16 %v1116, %v1112
    %v1169 = vpack.c.bf16 %v1117, %v1113
    %v1170 = vpack.c.bf16 %v1118, %v1114
    %v1171 = vpack.c.bf16 %v1119, %v1115
    %v1172 = vpack.c.bf16 %v1124, %v1120
    %v1173 = vpack.c.bf16 %v1125, %v1121
    %v1174 = vpack.c.bf16 %v1126, %v1122
    %v1175 = vpack.c.bf16 %v1127, %v1123
    %v1176 = vpack.c.bf16 %v1132, %v1128
    %v1177 = vpack.c.bf16 %v1133, %v1129
    %v1178 = vpack.c.bf16 %v1134, %v1130
    %v1179 = vpack.c.bf16 %v1135, %v1131
    %v1180 = vpack.c.bf16 %v1140, %v1136
    %v1181 = vpack.c.bf16 %v1141, %v1137
    %v1182 = vpack.c.bf16 %v1142, %v1138
    %v1183 = vpack.c.bf16 %v1143, %v1139
    %v1184 = vpack.c.bf16 %v1148, %v1144
    %v1185 = vpack.c.bf16 %v1149, %v1145
    %v1186 = vpack.c.bf16 %v1150, %v1146
    %v1187 = vpack.c.bf16 %v1151, %v1147
    %v1188 = vpack.c.bf16 %v1156, %v1152
    %v1189 = vpack.c.bf16 %v1157, %v1153
    %v1190 = vpack.c.bf16 %v1158, %v1154
    %v1191 = vpack.c.bf16 %v1159, %v1155
    %1192 = vmatprep.subr.bf16.mxu0 %v1161
    %1193 = vmatpush1.bf16.msra.mxu0 %v1160
    %1194 = vmatprep.subr.bf16.mxu0 %v1165
    %1195 = vmatpush1.bf16.msra.mxu0 %v1164
    %1196 = vmatprep.subr.bf16.mxu0 %v1169
    %1197 = vmatpush1.bf16.msra.mxu0 %v1168
    %1198 = vmatprep.subr.bf16.mxu0 %v1173
    %1199 = vmatpush1.bf16.msra.mxu0 %v1172
    %1200 = vmatprep.subr.bf16.mxu0 %v1177
    %1201 = vmatpush1.bf16.msra.mxu0 %v1176
    %1202 = vmatprep.subr.bf16.mxu0 %v1181
    %1203 = vmatpush1.bf16.msra.mxu0 %v1180
    %1204 = vmatprep.subr.bf16.mxu0 %v1185
    %1205 = vmatpush1.bf16.msra.mxu0 %v1184
    %1206 = vmatprep.subr.bf16.mxu0 %v1189
    %1207 = vmatpush1.bf16.msra.mxu0 %v1188
    %1208 = vmatprep.subr.bf16.mxu0 0
    %1209 = vmatpush1.bf16.msra.mxu0 0
    %1210 = vmatprep.subr.bf16.mxu0 0
    %1211 = vmatpush1.bf16.msra.mxu0 0
    %1212 = vmatprep.subr.bf16.mxu0 0
    %1213 = vmatpush1.bf16.msra.mxu0 0
    %1214 = vmatprep.subr.bf16.mxu0 0
    %1215 = vmatpush1.bf16.msra.mxu0 0
    %1216 = vmatprep.subr.bf16.mxu0 0
    %1217 = vmatpush1.bf16.msra.mxu0 0
    %1218 = vmatprep.subr.bf16.mxu0 0
    %1219 = vmatpush1.bf16.msra.mxu0 0
    %1220 = vmatprep.subr.bf16.mxu0 0
    %1221 = vmatpush1.bf16.msra.mxu0 0
    %1222 = vmatprep.subr.bf16.mxu0 0
    %1223 = vmatpush1.bf16.msra.mxu0 0
    %1224 = vmatprep.mubr.bf16.mxu0 0
    %1225 = vmatmul.mubr.bf16.gmra.mrb[0].mxu0 %v1095
    %v1226 = vpop.f32.mrb[0].mxu0
    %v1227 = vadd.f32 0.0, %v1226
    %v1228 = vpop.f32.mrb[0].mxu0
    %v1229 = vadd.f32 0.0, %v1228
    %v1230 = vpop.f32.mrb[0].mxu0
    %v1231 = vpop.f32.mrb[0].mxu0
    %1232 = vdwg.mxu0
    %1233 = vmatprep.subr.bf16.mxu0 %v1163
    %1234 = vmatpush1.bf16.msra.mxu0 %v1162
    %1235 = vmatprep.subr.bf16.mxu0 %v1167
    %1236 = vmatpush1.bf16.msra.mxu0 %v1166
    %1237 = vmatprep.subr.bf16.mxu0 %v1171
    %1238 = vmatpush1.bf16.msra.mxu0 %v1170
    %1239 = vmatprep.subr.bf16.mxu0 %v1175
    %1240 = vmatpush1.bf16.msra.mxu0 %v1174
    %1241 = vmatprep.subr.bf16.mxu0 %v1179
    %1242 = vmatpush1.bf16.msra.mxu0 %v1178
    %1243 = vmatprep.subr.bf16.mxu0 %v1183
    %1244 = vmatpush1.bf16.msra.mxu0 %v1182
    %1245 = vmatprep.subr.bf16.mxu0 %v1187
    %1246 = vmatpush1.bf16.msra.mxu0 %v1186
    %1247 = vmatprep.subr.bf16.mxu0 %v1191
    %1248 = vmatpush1.bf16.msra.mxu0 %v1190
    %1249 = vmatprep.subr.bf16.mxu0 0
    %1250 = vmatpush1.bf16.msra.mxu0 0
    %1251 = vmatprep.subr.bf16.mxu0 0
    %1252 = vmatpush1.bf16.msra.mxu0 0
    %1253 = vmatprep.subr.bf16.mxu0 0
    %1254 = vmatpush1.bf16.msra.mxu0 0
    %1255 = vmatprep.subr.bf16.mxu0 0
    %1256 = vmatpush1.bf16.msra.mxu0 0
    %1257 = vmatprep.subr.bf16.mxu0 0
    %1258 = vmatpush1.bf16.msra.mxu0 0
    %1259 = vmatprep.subr.bf16.mxu0 0
    %1260 = vmatpush1.bf16.msra.mxu0 0
    %1261 = vmatprep.subr.bf16.mxu0 0
    %1262 = vmatpush1.bf16.msra.mxu0 0
    %1263 = vmatprep.subr.bf16.mxu0 0
    %1264 = vmatpush1.bf16.msra.mxu0 0
    %1265 = vmatprep.mubr.bf16.mxu0 0
    %1266 = vmatmul.mubr.bf16.gmra.mrb[0].mxu0 %v1095
    %v1267 = vpop.f32.mrb[0].mxu0
    %v1268 = vadd.f32 0.0, %v1267
    %v1269 = vpop.f32.mrb[0].mxu0
    %v1270 = vadd.f32 0.0, %v1269
    %v1271 = vpop.f32.mrb[0].mxu0
    %v1272 = vpop.f32.mrb[0].mxu0
    %1273 = vdwg.mxu0
    %v1274 = vmax.f32 %v1227, 0.0
    %v1275 = vmax.f32 %v1229, 0.0
    %v1276 = vmax.f32 %v1268, 0.0
    %v1277 = vmax.f32 %v1270, 0.0
    %v1278 = vmul.f32 %v1274, %v551
    %v1279 = vmul.f32 %v1275, %v555
    %v1280 = vmul.f32 %v1276, %v559
    %v1281 = vmul.f32 %v1277, %v563
    %1282 = vrot.lane.b32.xlu0 %v1278, 16
    %v1283 = vpop.permute.xlu0 %1282
    %1284 = vrot.lane.b32.xlu0 %v1279, 16
    %v1285 = vpop.permute.xlu0 %1284
    %1286 = vrot.lane.b32.xlu0 %v1280, 16
    %v1287 = vpop.permute.xlu0 %1286
    %1288 = vrot.lane.b32.xlu0 %v1281, 16
    %v1289 = vpop.permute.xlu0 %1288
    %v1290 = vsel %vm172, %v1287, %v1289
    %v1291 = vsel %vm172, %v1285, %v1287
    %v1292 = vsel %vm172, %v1283, %v1285
    %v1293 = vsel %vm172, %v1289, %v1283
    %v1294 = vsel %vm181, %v1278, %v1293
    %v1295 = vsel %vm182, %v1279, %v1292
    %v1296 = vsel %vm183, %v1280, %v1291
    %v1297 = vsel %vm184, %v1281, %v1290
    %1298 = vrot.lane.b32.xlu0 %v1294, 1
    %v1299 = vpop.permute.xlu0 %1298
    %1300 = vrot.lane.b32.xlu0 %v1295, 1
    %v1301 = vpop.permute.xlu0 %1300
    %1302 = vrot.lane.b32.xlu0 %v1296, 1
    %v1303 = vpop.permute.xlu0 %1302
    %1304 = vrot.lane.b32.xlu0 %v1297, 1
    %v1305 = vpop.permute.xlu0 %1304
    %v1306 = vsel %vm197, %v1303, %v1305
    %v1307 = vsel %vm197, %v1301, %v1303
    %v1308 = vsel %vm197, %v1299, %v1301
    %v1309 = vsel %vm197, %v1305, %v1299
    %v1310 = vsel %vm206, %v1294, %v1309
    %v1311 = vsel %vm207, %v1295, %v1308
    %v1312 = vsel %vm208, %v1296, %v1307
    %v1313 = vsel %vm209, %v1297, %v1306
    %1314 = vst [vmem:[#allocation2] sm:$0xff] %v1310
    %1315 = vst [vmem:[#allocation2 + $0x8] sm:$0xff] %v1311
    %1316 = vst [vmem:[#allocation2 + $0x10] sm:$0xff] %v1312
    %1317 = vst [vmem:[#allocation2 + $0x18] sm:$0xff] %v1313
    %1318 = vst [vmem:[#allocation2 + $0x20] sm:$0xff] %v1294
    %1319 = vst [vmem:[#allocation2 + $0x28] sm:$0xff] %v1295
    %1320 = vst [vmem:[#allocation2 + $0x30] sm:$0xff] %v1296
    %1321 = vst [vmem:[#allocation2 + $0x38] sm:$0xff] %v1297
    %1322 = vrot.lane.b32.xlu0 %v1294, 127
    %v1323 = vpop.permute.xlu0 %1322
    %1324 = vrot.lane.b32.xlu0 %v1295, 127
    %v1325 = vpop.permute.xlu0 %1324
    %1326 = vrot.lane.b32.xlu0 %v1296, 127
    %v1327 = vpop.permute.xlu0 %1326
    %1328 = vrot.lane.b32.xlu0 %v1297, 127
    %v1329 = vpop.permute.xlu0 %1328
    %v1330 = vsel %vm230, %v1327, %v1329
    %v1331 = vsel %vm230, %v1325, %v1327
    %v1332 = vsel %vm230, %v1323, %v1325
    %v1333 = vsel %vm230, %v1329, %v1323
    %v1334 = vsel %vm239, %v1294, %v1332
    %v1335 = vsel %vm240, %v1295, %v1331
    %v1336 = vsel %vm241, %v1296, %v1330
    %v1337 = vsel %vm242, %v1297, %v1333
    %1338 = vst [vmem:[#allocation2 + $0x40] sm:$0xff] %v1334
    %1339 = vst [vmem:[#allocation2 + $0x48] sm:$0xff] %v1335
    %1340 = vst [vmem:[#allocation2 + $0x50] sm:$0xff] %v1336
    %1341 = vst [vmem:[#allocation2 + $0x58] sm:$0xff] %v1337
    %1342 = vrot.lane.b32.xlu0 %v1278, 1
    %v1343 = vpop.permute.xlu0 %1342
    %1344 = vrot.lane.b32.xlu0 %v1279, 1
    %v1345 = vpop.permute.xlu0 %1344
    %1346 = vrot.lane.b32.xlu0 %v1280, 1
    %v1347 = vpop.permute.xlu0 %1346
    %1348 = vrot.lane.b32.xlu0 %v1281, 1
    %v1349 = vpop.permute.xlu0 %1348
    %v1350 = vsel %vm197, %v1347, %v1349
    %v1351 = vsel %vm197, %v1345, %v1347
    %v1352 = vsel %vm197, %v1343, %v1345
    %v1353 = vsel %vm197, %v1349, %v1343
    %v1354 = vsel %vm206, %v1278, %v1353
    %v1355 = vsel %vm207, %v1279, %v1352
    %v1356 = vsel %vm208, %v1280, %v1351
    %v1357 = vsel %vm209, %v1281, %v1350
    %1358 = vst [vmem:[#allocation2 + $0x60] sm:$0xff] %v1354
    %1359 = vst [vmem:[#allocation2 + $0x68] sm:$0xff] %v1355
    %1360 = vst [vmem:[#allocation2 + $0x70] sm:$0xff] %v1356
    %1361 = vst [vmem:[#allocation2 + $0x78] sm:$0xff] %v1357
    %1362 = vst [vmem:[#allocation2 + $0x80] sm:$0xff] %v1278
    %1363 = vst [vmem:[#allocation2 + $0x88] sm:$0xff] %v1279
    %1364 = vst [vmem:[#allocation2 + $0x90] sm:$0xff] %v1280
    %1365 = vst [vmem:[#allocation2 + $0x98] sm:$0xff] %v1281
    %1366 = vrot.lane.b32.xlu0 %v1278, 127
    %v1367 = vpop.permute.xlu0 %1366
    %1368 = vrot.lane.b32.xlu0 %v1279, 127
    %v1369 = vpop.permute.xlu0 %1368
    %1370 = vrot.lane.b32.xlu0 %v1280, 127
    %v1371 = vpop.permute.xlu0 %1370
    %1372 = vrot.lane.b32.xlu0 %v1281, 127
    %v1373 = vpop.permute.xlu0 %1372
    %v1374 = vsel %vm230, %v1371, %v1373
    %v1375 = vsel %vm230, %v1369, %v1371
    %v1376 = vsel %vm230, %v1367, %v1369
    %v1377 = vsel %vm230, %v1373, %v1367
    %v1378 = vsel %vm239, %v1278, %v1376
    %v1379 = vsel %vm240, %v1279, %v1375
    %v1380 = vsel %vm241, %v1280, %v1374
    %v1381 = vsel %vm242, %v1281, %v1377
    %1382 = vst [vmem:[#allocation2 + $0xa0] sm:$0xff] %v1378
    %1383 = vst [vmem:[#allocation2 + $0xa8] sm:$0xff] %v1379
    %1384 = vst [vmem:[#allocation2 + $0xb0] sm:$0xff] %v1380
    %1385 = vst [vmem:[#allocation2 + $0xb8] sm:$0xff] %v1381
    %1386 = vrot.lane.b32.xlu0 %v1278, 112
    %v1387 = vpop.permute.xlu0 %1386
    %1388 = vrot.lane.b32.xlu0 %v1279, 112
    %v1389 = vpop.permute.xlu0 %1388
    %1390 = vrot.lane.b32.xlu0 %v1280, 112
    %v1391 = vpop.permute.xlu0 %1390
    %1392 = vrot.lane.b32.xlu0 %v1281, 112
    %v1393 = vpop.permute.xlu0 %1392
    %v1394 = vsel %vm303, %v1391, %v1393
    %v1395 = vsel %vm303, %v1389, %v1391
    %v1396 = vsel %vm303, %v1387, %v1389
    %v1397 = vsel %vm303, %v1393, %v1387
    %v1398 = vsel %vm312, %v1278, %v1396
    %v1399 = vsel %vm313, %v1279, %v1395
    %v1400 = vsel %vm314, %v1280, %v1394
    %v1401 = vsel %vm315, %v1281, %v1397
    %1402 = vrot.lane.b32.xlu0 %v1398, 1
    %v1403 = vpop.permute.xlu0 %1402
    %1404 = vrot.lane.b32.xlu0 %v1399, 1
    %v1405 = vpop.permute.xlu0 %1404
    %1406 = vrot.lane.b32.xlu0 %v1400, 1
    %v1407 = vpop.permute.xlu0 %1406
    %1408 = vrot.lane.b32.xlu0 %v1401, 1
    %v1409 = vpop.permute.xlu0 %1408
    %v1410 = vsel %vm197, %v1407, %v1409
    %v1411 = vsel %vm197, %v1405, %v1407
    %v1412 = vsel %vm197, %v1403, %v1405
    %v1413 = vsel %vm197, %v1409, %v1403
    %v1414 = vsel %vm206, %v1398, %v1413
    %v1415 = vsel %vm207, %v1399, %v1412
    %v1416 = vsel %vm208, %v1400, %v1411
    %v1417 = vsel %vm209, %v1401, %v1410
    %1418 = vst [vmem:[#allocation2 + $0xc0] sm:$0xff] %v1414
    %1419 = vst [vmem:[#allocation2 + $0xc8] sm:$0xff] %v1415
    %1420 = vst [vmem:[#allocation2 + $0xd0] sm:$0xff] %v1416
    %1421 = vst [vmem:[#allocation2 + $0xd8] sm:$0xff] %v1417
    %1422 = vst [vmem:[#allocation2 + $0xe0] sm:$0xff] %v1398
    %1423 = vst [vmem:[#allocation2 + $0xe8] sm:$0xff] %v1399
    %1424 = vst [vmem:[#allocation2 + $0xf0] sm:$0xff] %v1400
    %1425 = vst [vmem:[#allocation2 + $0xf8] sm:$0xff] %v1401
    %1426 = vrot.lane.b32.xlu0 %v1398, 127
    %v1427 = vpop.permute.xlu0 %1426
    %1428 = vrot.lane.b32.xlu0 %v1399, 127
    %v1429 = vpop.permute.xlu0 %1428
    %1430 = vrot.lane.b32.xlu0 %v1400, 127
    %v1431 = vpop.permute.xlu0 %1430
    %1432 = vrot.lane.b32.xlu0 %v1401, 127
    %v1433 = vpop.permute.xlu0 %1432
    %v1434 = vsel %vm230, %v1431, %v1433
    %v1435 = vsel %vm230, %v1429, %v1431
    %v1436 = vsel %vm230, %v1427, %v1429
    %v1437 = vsel %vm230, %v1433, %v1427
    %v1438 = vsel %vm239, %v1398, %v1436
    %v1439 = vsel %vm240, %v1399, %v1435
    %v1440 = vsel %vm241, %v1400, %v1434
    %v1441 = vsel %vm242, %v1401, %v1437
    %1442 = vst [vmem:[#allocation2 + $0x100] sm:$0xff] %v1438
    %1443 = vst [vmem:[#allocation2 + $0x108] sm:$0xff] %v1439
    %1444 = vst [vmem:[#allocation2 + $0x110] sm:$0xff] %v1440
    %1445 = vst [vmem:[#allocation2 + $0x118] sm:$0xff] %v1441
    %v1446 = vld [vmem:[#allocation8 + $0xc] sm:$0xf]
    %v1447 = vld [vmem:[#allocation2] sm:$0xff]
    %v1448 = vld [vmem:[#allocation2 + $0x8] sm:$0xff]
    %v1449 = vld [vmem:[#allocation2 + $0x10] sm:$0xff]
    %v1450 = vld [vmem:[#allocation2 + $0x18] sm:$0xff]
    %v1451 = vld [vmem:[#allocation2 + $0x20] sm:$0xff]
    %v1452 = vld [vmem:[#allocation2 + $0x28] sm:$0xff]
    %v1453 = vld [vmem:[#allocation2 + $0x30] sm:$0xff]
    %v1454 = vld [vmem:[#allocation2 + $0x38] sm:$0xff]
    %v1455 = vld [vmem:[#allocation2 + $0x40] sm:$0xff]
    %v1456 = vld [vmem:[#allocation2 + $0x48] sm:$0xff]
    %v1457 = vld [vmem:[#allocation2 + $0x50] sm:$0xff]
    %v1458 = vld [vmem:[#allocation2 + $0x58] sm:$0xff]
    %v1459 = vld [vmem:[#allocation2 + $0x60] sm:$0xff]
    %v1460 = vld [vmem:[#allocation2 + $0x68] sm:$0xff]
    %v1461 = vld [vmem:[#allocation2 + $0x70] sm:$0xff]
    %v1462 = vld [vmem:[#allocation2 + $0x78] sm:$0xff]
    %v1463 = vld [vmem:[#allocation2 + $0x80] sm:$0xff]
    %v1464 = vld [vmem:[#allocation2 + $0x88] sm:$0xff]
    %v1465 = vld [vmem:[#allocation2 + $0x90] sm:$0xff]
    %v1466 = vld [vmem:[#allocation2 + $0x98] sm:$0xff]
    %v1467 = vld [vmem:[#allocation2 + $0xa0] sm:$0xff]
    %v1468 = vld [vmem:[#allocation2 + $0xa8] sm:$0xff]
    %v1469 = vld [vmem:[#allocation2 + $0xb0] sm:$0xff]
    %v1470 = vld [vmem:[#allocation2 + $0xb8] sm:$0xff]
    %v1471 = vld [vmem:[#allocation2 + $0xc0] sm:$0xff]
    %v1472 = vld [vmem:[#allocation2 + $0xc8] sm:$0xff]
    %v1473 = vld [vmem:[#allocation2 + $0xd0] sm:$0xff]
    %v1474 = vld [vmem:[#allocation2 + $0xd8] sm:$0xff]
    %v1475 = vld [vmem:[#allocation2 + $0xe0] sm:$0xff]
    %v1476 = vld [vmem:[#allocation2 + $0xe8] sm:$0xff]
    %v1477 = vld [vmem:[#allocation2 + $0xf0] sm:$0xff]
    %v1478 = vld [vmem:[#allocation2 + $0xf8] sm:$0xff]
    %v1479 = vld [vmem:[#allocation2 + $0x100] sm:$0xff]
    %v1480 = vld [vmem:[#allocation2 + $0x108] sm:$0xff]
    %v1481 = vld [vmem:[#allocation2 + $0x110] sm:$0xff]
    %v1482 = vld [vmem:[#allocation2 + $0x118] sm:$0xff]
    %v1483 = vld [vmem:[#allocation2 + $0x120] sm:$0xff]
    %v1484 = vld [vmem:[#allocation2 + $0x128] sm:$0xff]
    %v1485 = vld [vmem:[#allocation2 + $0x130] sm:$0xff]
    %v1486 = vld [vmem:[#allocation2 + $0x138] sm:$0xff]
    %v1487 = vld [vmem:[#allocation2 + $0x140] sm:$0xff]
    %v1488 = vld [vmem:[#allocation2 + $0x148] sm:$0xff]
    %v1489 = vld [vmem:[#allocation2 + $0x150] sm:$0xff]
    %v1490 = vld [vmem:[#allocation2 + $0x158] sm:$0xff]
    %v1491 = vld [vmem:[#allocation2 + $0x160] sm:$0xff]
    %v1492 = vld [vmem:[#allocation2 + $0x168] sm:$0xff]
    %v1493 = vld [vmem:[#allocation2 + $0x170] sm:$0xff]
    %v1494 = vld [vmem:[#allocation2 + $0x178] sm:$0xff]
    %v1495 = vld [vmem:[#allocation2 + $0x180] sm:$0xff]
    %v1496 = vld [vmem:[#allocation2 + $0x188] sm:$0xff]
    %v1497 = vld [vmem:[#allocation2 + $0x190] sm:$0xff]
    %v1498 = vld [vmem:[#allocation2 + $0x198] sm:$0xff]
    %v1499 = vld [vmem:[#allocation2 + $0x1a0] sm:$0xff]
    %v1500 = vld [vmem:[#allocation2 + $0x1a8] sm:$0xff]
    %v1501 = vld [vmem:[#allocation2 + $0x1b0] sm:$0xff]
    %v1502 = vld [vmem:[#allocation2 + $0x1b8] sm:$0xff]
    %v1503 = vld [vmem:[#allocation2 + $0x1c0] sm:$0xff]
    %v1504 = vld [vmem:[#allocation2 + $0x1c8] sm:$0xff]
    %v1505 = vld [vmem:[#allocation2 + $0x1d0] sm:$0xff]
    %v1506 = vld [vmem:[#allocation2 + $0x1d8] sm:$0xff]
    %v1507 = vld [vmem:[#allocation2 + $0x1e0] sm:$0xff]
    %v1508 = vld [vmem:[#allocation2 + $0x1e8] sm:$0xff]
    %v1509 = vld [vmem:[#allocation2 + $0x1f0] sm:$0xff]
    %v1510 = vld [vmem:[#allocation2 + $0x1f8] sm:$0xff]
    %v1511 = vpack.c.bf16 %v1451, %v1447
    %v1512 = vpack.c.bf16 %v1452, %v1448
    %v1513 = vpack.c.bf16 %v1453, %v1449
    %v1514 = vpack.c.bf16 %v1454, %v1450
    %v1515 = vpack.c.bf16 %v1459, %v1455
    %v1516 = vpack.c.bf16 %v1460, %v1456
    %v1517 = vpack.c.bf16 %v1461, %v1457
    %v1518 = vpack.c.bf16 %v1462, %v1458
    %v1519 = vpack.c.bf16 %v1467, %v1463
    %v1520 = vpack.c.bf16 %v1468, %v1464
    %v1521 = vpack.c.bf16 %v1469, %v1465
    %v1522 = vpack.c.bf16 %v1470, %v1466
    %v1523 = vpack.c.bf16 %v1475, %v1471
    %v1524 = vpack.c.bf16 %v1476, %v1472
    %v1525 = vpack.c.bf16 %v1477, %v1473
    %v1526 = vpack.c.bf16 %v1478, %v1474
    %v1527 = vpack.c.bf16 %v1483, %v1479
    %v1528 = vpack.c.bf16 %v1484, %v1480
    %v1529 = vpack.c.bf16 %v1485, %v1481
    %v1530 = vpack.c.bf16 %v1486, %v1482
    %v1531 = vpack.c.bf16 %v1491, %v1487
    %v1532 = vpack.c.bf16 %v1492, %v1488
    %v1533 = vpack.c.bf16 %v1493, %v1489
    %v1534 = vpack.c.bf16 %v1494, %v1490
    %v1535 = vpack.c.bf16 %v1499, %v1495
    %v1536 = vpack.c.bf16 %v1500, %v1496
    %v1537 = vpack.c.bf16 %v1501, %v1497
    %v1538 = vpack.c.bf16 %v1502, %v1498
    %v1539 = vpack.c.bf16 %v1507, %v1503
    %v1540 = vpack.c.bf16 %v1508, %v1504
    %v1541 = vpack.c.bf16 %v1509, %v1505
    %v1542 = vpack.c.bf16 %v1510, %v1506
    %1543 = vmatprep.subr.bf16.mxu0 %v1512
    %1544 = vmatpush1.bf16.msra.mxu0 %v1511
    %1545 = vmatprep.subr.bf16.mxu0 %v1516
    %1546 = vmatpush1.bf16.msra.mxu0 %v1515
    %1547 = vmatprep.subr.bf16.mxu0 %v1520
    %1548 = vmatpush1.bf16.msra.mxu0 %v1519
    %1549 = vmatprep.subr.bf16.mxu0 %v1524
    %1550 = vmatpush1.bf16.msra.mxu0 %v1523
    %1551 = vmatprep.subr.bf16.mxu0 %v1528
    %1552 = vmatpush1.bf16.msra.mxu0 %v1527
    %1553 = vmatprep.subr.bf16.mxu0 %v1532
    %1554 = vmatpush1.bf16.msra.mxu0 %v1531
    %1555 = vmatprep.subr.bf16.mxu0 %v1536
    %1556 = vmatpush1.bf16.msra.mxu0 %v1535
    %1557 = vmatprep.subr.bf16.mxu0 %v1540
    %1558 = vmatpush1.bf16.msra.mxu0 %v1539
    %1559 = vmatprep.subr.bf16.mxu0 0
    %1560 = vmatpush1.bf16.msra.mxu0 0
    %1561 = vmatprep.subr.bf16.mxu0 0
    %1562 = vmatpush1.bf16.msra.mxu0 0
    %1563 = vmatprep.subr.bf16.mxu0 0
    %1564 = vmatpush1.bf16.msra.mxu0 0
    %1565 = vmatprep.subr.bf16.mxu0 0
    %1566 = vmatpush1.bf16.msra.mxu0 0
    %1567 = vmatprep.subr.bf16.mxu0 0
    %1568 = vmatpush1.bf16.msra.mxu0 0
    %1569 = vmatprep.subr.bf16.mxu0 0
    %1570 = vmatpush1.bf16.msra.mxu0 0
    %1571 = vmatprep.subr.bf16.mxu0 0
    %1572 = vmatpush1.bf16.msra.mxu0 0
    %1573 = vmatprep.subr.bf16.mxu0 0
    %1574 = vmatpush1.bf16.msra.mxu0 0
    %1575 = vmatprep.mubr.bf16.mxu0 0
    %1576 = vmatmul.mubr.bf16.gmra.mrb[0].mxu0 %v1446
    %v1577 = vpop.f32.mrb[0].mxu0
    %v1578 = vadd.f32 0.0, %v1577
    %v1579 = vpop.f32.mrb[0].mxu0
    %v1580 = vadd.f32 0.0, %v1579
    %v1581 = vpop.f32.mrb[0].mxu0
    %v1582 = vpop.f32.mrb[0].mxu0
    %1583 = vdwg.mxu0
    %1584 = vmatprep.subr.bf16.mxu0 %v1514
    %1585 = vmatpush1.bf16.msra.mxu0 %v1513
    %1586 = vmatprep.subr.bf16.mxu0 %v1518
    %1587 = vmatpush1.bf16.msra.mxu0 %v1517
    %1588 = vmatprep.subr.bf16.mxu0 %v1522
    %1589 = vmatpush1.bf16.msra.mxu0 %v1521
    %1590 = vmatprep.subr.bf16.mxu0 %v1526
    %1591 = vmatpush1.bf16.msra.mxu0 %v1525
    %1592 = vmatprep.subr.bf16.mxu0 %v1530
    %1593 = vmatpush1.bf16.msra.mxu0 %v1529
    %1594 = vmatprep.subr.bf16.mxu0 %v1534
    %1595 = vmatpush1.bf16.msra.mxu0 %v1533
    %1596 = vmatprep.subr.bf16.mxu0 %v1538
    %1597 = vmatpush1.bf16.msra.mxu0 %v1537
    %1598 = vmatprep.subr.bf16.mxu0 %v1542
    %1599 = vmatpush1.bf16.msra.mxu0 %v1541
    %1600 = vmatprep.subr.bf16.mxu0 0
    %1601 = vmatpush1.bf16.msra.mxu0 0
    %1602 = vmatprep.subr.bf16.mxu0 0
    %1603 = vmatpush1.bf16.msra.mxu0 0
    %1604 = vmatprep.subr.bf16.mxu0 0
    %1605 = vmatpush1.bf16.msra.mxu0 0
    %1606 = vmatprep.subr.bf16.mxu0 0
    %1607 = vmatpush1.bf16.msra.mxu0 0
    %1608 = vmatprep.subr.bf16.mxu0 0
    %1609 = vmatpush1.bf16.msra.mxu0 0
    %1610 = vmatprep.subr.bf16.mxu0 0
    %1611 = vmatpush1.bf16.msra.mxu0 0
    %1612 = vmatprep.subr.bf16.mxu0 0
    %1613 = vmatpush1.bf16.msra.mxu0 0
    %1614 = vmatprep.subr.bf16.mxu0 0
    %1615 = vmatpush1.bf16.msra.mxu0 0
    %1616 = vmatprep.mubr.bf16.mxu0 0
    %1617 = vmatmul.mubr.bf16.gmra.mrb[0].mxu0 %v1446
    %v1618 = vpop.f32.mrb[0].mxu0
    %v1619 = vadd.f32 0.0, %v1618
    %v1620 = vpop.f32.mrb[0].mxu0
    %v1621 = vadd.f32 0.0, %v1620
    %v1622 = vpop.f32.mrb[0].mxu0
    %v1623 = vpop.f32.mrb[0].mxu0
    %1624 = vdwg.mxu0
    %v1625 = vmul.f32 %v1578, %v551
    %v1626 = vmul.f32 %v1580, %v555
    %v1627 = vmul.f32 %v1619, %v559
    %v1628 = vmul.f32 %v1621, %v563
    %v1629 = vxor.u32 %v1625, 2147483648
    %v1630 = vxor.u32 %v1626, 2147483648
    %v1631 = vxor.u32 %v1627, 2147483648
    %v1632 = vxor.u32 %v1628, 2147483648
    %v1633 = vmul.f32 %v1629, 1.442695
    %v1634 = vpow.pop %v1633
    %v1635 = vmul.f32 %v1630, 1.442695
    %v1636 = vpow.pop %v1635
    %v1637 = vmul.f32 %v1631, 1.442695
    %v1638 = vpow.pop %v1637
    %v1639 = vmul.f32 %v1632, 1.442695
    %v1640 = vpow.pop %v1639
    %v1641 = vadd.f32 %v1634, 1.0
    %v1642 = vadd.f32 %v1636, 1.0
    %v1643 = vadd.f32 %v1638, 1.0
    %v1644 = vadd.f32 %v1640, 1.0
    %v1645 = vrcp.pop %v1641
    %v1646 = vmul.f32 1.0, %v1645
    %v1647 = vrcp.pop %v1642
    %v1648 = vmul.f32 1.0, %v1647
    %v1649 = vrcp.pop %v1643
    %v1650 = vmul.f32 1.0, %v1649
    %v1651 = vrcp.pop %v1644
    %v1652 = vmul.f32 1.0, %v1651
    %v1653 = vmul.f32 %v1646, %v551
    %v1654 = vmul.f32 %v1648, %v555
    %v1655 = vmul.f32 %v1650, %v559
    %v1656 = vmul.f32 %v1652, %v563
    %v1661 = vcombine.low %v1653, %v1654
    %v1662 = vcombine.low %v1655, %v1656
    %v1664 = vunpack.c.l.s4 1966171168
    %v1665 = vunpack.c.0.s8 %v1664
    %v1666 = vlaneseq
    %v1667 = vshrl.u32 %v1666, 7
    %v1668 = vsub.s32 %v1665, %v1667
    %v1669 = vrot.slane %v1661, %v1668
    %v1671 = vunpack.c.l.s4 1966171168
    %v1672 = vunpack.c.0.s8 %v1671
    %v1673 = vlaneseq
    %v1674 = vshrl.u32 %v1673, 7
    %v1675 = vsub.s32 %v1672, %v1674
    %v1676 = vrot.slane %v1662, %v1675
    %v1677 = vcombine.low %v1669, %v1676
    %v1679 = vunpack.c.l.s4 1966171168
    %v1680 = vunpack.c.0.s8 %v1679
    %v1681 = vlaneseq
    %v1682 = vshrl.u32 %v1681, 7
    %v1683 = vsub.s32 %v1680, %v1682
    %v1684 = vrot.slane %v1677, %v1683
    %1686 = vst.msk [vmem:[#allocation9] sm:$0xf] %vm122, %v1684
    // Predicated region
    $region26: #{tpu_custom_call.1} parent=1 // pred_check
      _
    $region27: #{tpu_custom_call.1} parent=1 // pred_check_branch
      %1688 = sbr.rel (0) target = $region29
    $region28: #{tpu_custom_call.1} parent=1 // pred_region
      %s1690 = ssub.s32 64, 64
      %1691 = vsyncadd [#allocation5], %s1690
      %s1693 = sshll.u32 [#allocation9], 4
      %s1694 = int_to_ptr.vmem [resolvable:$true] %s1693
      %1696 = dma.vmem_to_hbm [thread:$0]  %s1694, 64, %s3, [#allocation5]
    $region29: #{tpu_custom_call.1} parent=1 // pred_fallthru
      _
    // Predicated region
    $region30: #{tpu_custom_call.1} parent=1 // pred_check
      _
    $region31: #{tpu_custom_call.1} parent=1 // pred_check_branch
      %1698 = sbr.rel (0) target = $region33
    $region32: #{tpu_custom_call.1} parent=1 // pred_region
      %1699 = dma.done [#allocation5], 64
    $region33: #{tpu_custom_call.1} parent=1 // pred_fallthru
      _
    %1700 = vsyncpa [#allocation4], 1
    %1701 = vsyncpa [#allocation7], 1
    %1702 = vsyncpa [#allocation5], 1

</llo_original>
